<compile_context>
chip_gen: v7x
topology: tpu7x:2x2x1
jax: 0.10.0
libtpu: 0.0.40
codegen_flags: <defaults>
</compile_context>

<pallas_src>
import jax
import jax.numpy as jnp
from jax.experimental import pallas as pl
from jax.experimental.pallas import tpu as pltpu


def _round_up(x, m):
    return ((x + m - 1) // m) * m


def _choose_tiles(n, hw, ep_p):
    """Pick batch tile, spatial tile, spatial sub-chunk and padded spatial extent."""
    # Batch tile: as large as possible (amortize ~0.35us/step overhead, feed the MXU
    # epilogue), capped at 128; keep >=2 programs on the parallel axis when batch
    # allows it (v7x megacore).
    tb = min(128, _round_up(max(n, 1), 8))
    if _round_up(n, tb) // tb < 2 and tb > 8:
        tb = max(8, _round_up(tb // 2, 8))
    # Spatial: pad HW to a 128 multiple (lane-dense blocks); grid tile thw is the
    # largest of {1024, 512, 256, 128} dividing the padded extent.
    hwp = _round_up(hw, 128)
    thw = next(t for t in (1024, 512, 256, 128) if hwp % t == 0)
    # Sub-chunk of thw per inner step so the implicit f32 intermediates
    # (transposed x slab + conv output ~ tb*tsub*(128 + Ep)*4 B) stay within budget.
    budget = 6 * 1024 * 1024
    tsub = 128
    while tsub * 2 <= thw and tb * (tsub * 2) * (128 + ep_p) * 4 <= budget:
        tsub *= 2
    return tb, thw, tsub, hwp


# ---------------------------------------------------------------------------
# Fused kernel: pointwise conv + ReLU + GAP (f32 sum over spatial tiles) + all
# classification heads as one lane-dense matmul epilogue.
# ---------------------------------------------------------------------------
def _make_fused_kernel(hw, hwp, thw, tsub):
    nsub = thw // tsub            # static sub-chunks per spatial grid tile
    n_pad_spatial = hwp - hw      # zero-padded spatial positions (static)
    inv_hw = 1.0 / float(hw)

    def kernel(x_ref, wc_ref, bc_ref, wa_ref, ba_ref, out_ref, acc_ref):
        # x_ref:   (TB, C, thw)  f32  NCHW slab, spatial lane-dense
        # wc_ref:  (C, Ep)       bf16 1x1-conv weight (emb dim zero-padded to Ep)
        # bc_ref:  (1, Ep)       f32  conv bias
        # wa_ref:  (Ep, Tp)      bf16 concatenated head weights
        # ba_ref:  (1, Tp)       f32  concatenated head biases
        # out_ref: (TB, Tp)      f32  concatenated logits for this batch tile
        # acc_ref: (TB, Ep)      f32  GAP (sum) accumulator across spatial tiles
        j = pl.program_id(1)

        @pl.when(j == 0)
        def _():
            acc_ref[...] = jnp.zeros_like(acc_ref)

        tb, c, _ = x_ref.shape
        ep = acc_ref.shape[1]

        def conv_gap(xk):
            # xk: (tb, c, ts) f32.  NCHW->NHWC swap on the XLU, bf16 cast on the VPU.
            tb_, c_, ts = xk.shape
            xk_t = jnp.transpose(xk, (0, 2, 1))                         # (tb, ts, c)
            x2 = xk_t.reshape(tb_ * ts, c_).astype(jnp.bfloat16)
            y = jnp.dot(x2, wc_ref[...], preferred_element_type=jnp.float32)  # MXU
            y = jnp.maximum(y + bc_ref[...], 0.0)                        # f32 bias+ReLU
            return jnp.sum(y.reshape(tb_, ts, ep), axis=1)               # partial GAP

        if nsub == 1:
            partial = conv_gap(x_ref[...])
        else:
            # Sub-chunk the spatial tile to bound the implicit f32 intermediates.
            def body(k, acc):
                s0 = pl.multiple_of(k * tsub, 128)
                return acc + conv_gap(x_ref[:, :, pl.ds(s0, tsub)])
            partial = jax.lax.fori_loop(0, nsub, body,
                                        jnp.zeros((tb, ep), jnp.float32),
                                        unroll=True)
        acc_ref[...] += partial

        @pl.when(j == pl.num_programs(1) - 1)
        def _():
            gap = acc_ref[...]
            if n_pad_spatial:
                # Zero-padded spatial positions each contributed ReLU(conv_bias).
                gap = gap - float(n_pad_spatial) * jnp.maximum(bc_ref[...], 0.0)
            emb = (gap * inv_hw).astype(wa_ref.dtype)        # 1/HW in f32, then bf16
            logits = jnp.dot(emb, wa_ref[...], preferred_element_type=jnp.float32)
            out_ref[...] = (logits + ba_ref[...]).astype(out_ref.dtype)

    return kernel


def run_fused(x, wc, bc, wa, ba, *, hw, tb, thw, tsub):
    # x: (Np, C, HWp) f32;  wc: (C, Ep) bf16;  bc: (1, Ep) f32;
    # wa: (Ep, Tp) bf16;    ba: (1, Tp) f32.
    Np, C, hwp = x.shape
    Ep = wc.shape[1]
    Tp = wa.shape[1]
    grid = (Np // tb, hwp // thw)
    kernel = _make_fused_kernel(hw, hwp, thw, tsub)
    return pl.pallas_call(
        kernel,
        out_shape=jax.ShapeDtypeStruct((Np, Tp), jnp.float32),
        grid_spec=pltpu.PrefetchScalarGridSpec(
            num_scalar_prefetch=0,
            grid=grid,
            in_specs=[
                pl.BlockSpec((tb, C, thw), lambda i, j: (i, 0, j)),
                # Grid-invariant weights/biases (for huge real-backbone weights on
                # v7x, mark these pipeline_mode=pl.Buffered(1) to halve their VMEM).
                pl.BlockSpec((C, Ep), lambda i, j: (0, 0)),
                pl.BlockSpec((1, Ep), lambda i, j: (0, 0)),
                pl.BlockSpec((Ep, Tp), lambda i, j: (0, 0)),
                pl.BlockSpec((1, Tp), lambda i, j: (0, 0)),
            ],
            out_specs=pl.BlockSpec((tb, Tp), lambda i, j: (i, 0)),
            scratch_shapes=[pltpu.VMEM((tb, Ep), jnp.float32)],
        ),
        compiler_params=pltpu.CompilerParams(
            dimension_semantics=("parallel", "arbitrary"),
            vmem_limit_bytes=64 * 1024 * 1024,
        ),
    )(x, wc, bc, wa, ba)


# ---------------------------------------------------------------------------
# One-time parameter preprocessing (hoisted out of the forward pass):
# concat + zero-pad head weights/biases, pad emb dim, cast weights to bf16.
# (The 1/HW GAP scale is NOT folded into the weights; it is applied in f32
# inside the kernel epilogue.)
# ---------------------------------------------------------------------------
def prepare_fused_params(params, classes):
    C, E = params["conv_w"].shape
    names = list(classes.keys())
    sizes = [len(classes[n]) for n in names]
    T = sum(sizes)
    Ep = _round_up(E, 128)
    Tp = _round_up(T, 128)

    wc = jnp.zeros((C, Ep), jnp.float32).at[:, :E].set(params["conv_w"])
    bc = jnp.zeros((1, Ep), jnp.float32).at[:, :E].set(params["conv_b"])

    w_all = jnp.concatenate([params["heads"][n]["w"] for n in names], axis=1)  # (E, T)
    b_all = jnp.concatenate([params["heads"][n]["b"] for n in names], axis=1)  # (1, T)
    wa = jnp.zeros((Ep, Tp), jnp.float32).at[:E, :T].set(w_all)
    ba = jnp.zeros((1, Tp), jnp.float32).at[:, :T].set(b_all)

    return {
        "wc": wc.astype(jnp.bfloat16),
        "bc": bc,                          # bias + ReLU stay in f32 (v5e-safe)
        "wa": wa.astype(jnp.bfloat16),
        "ba": ba,
        "names": names,
        "sizes": sizes,
    }


# ---------------------------------------------------------------------------
# MultilabelModel forward: single fused kernel -> dict of per-target logits.
# ---------------------------------------------------------------------------
def multilabel_model_forward(x_nchw, fused):
    """x_nchw: (N, C, H, W) float32.  Returns {target_name: (N, n_classes)} f32."""
    N, C, H, W = x_nchw.shape
    HW = H * W
    Ep = fused["wc"].shape[1]
    tb, thw, tsub, hwp = _choose_tiles(N, HW, Ep)

    # Free reshape of the NCHW activation: no transpose, no cast, no extra HBM pass.
    x3 = x_nchw.reshape(N, C, HW)
    if hwp != HW:                       # pad spatial to a 128 multiple (bias-corrected in-kernel)
        x3 = jnp.pad(x3, ((0, 0), (0, 0), (0, hwp - HW)))
    Np = _round_up(N, tb)
    if Np != N:                         # pad batch to the tile (padded rows sliced off below)
        x3 = jnp.pad(x3, ((0, Np - N), (0, 0), (0, 0)))

    logits_all = run_fused(x3, fused["wc"], fused["bc"], fused["wa"], fused["ba"],
                           hw=HW, tb=tb, thw=thw, tsub=tsub)[:N]

    out, off = {}, 0
    for name, k in zip(fused["names"], fused["sizes"]):
        out[name] = logits_all[:, off:off + k]   # drop lane padding per head
        off += k
    return out


def init_params(key, in_channels, emb_size, classes):
    kc, kb, *kh = jax.random.split(key, 2 + 2 * len(classes))
    params = {
        "conv_w": jax.random.normal(kc, (in_channels, emb_size), jnp.float32) * 0.1,
        "conv_b": jax.random.normal(kb, (1, emb_size), jnp.float32) * 0.01,
        "heads": {},
    }
    for i, (name, labels) in enumerate(classes.items()):
        n_cls = len(labels)
        params["heads"][name] = {
            "w": jax.random.normal(kh[2 * i], (emb_size, n_cls), jnp.float32) * 0.1,
            "b": jax.random.normal(kh[2 * i + 1], (1, n_cls), jnp.float32) * 0.01,
        }
    return params


if __name__ == "__main__":
    key = jax.random.PRNGKey(0)
    kx, kp = jax.random.split(key)

    N, C, H, W = 2, 4, 16, 16
    EMB = 32
    classes = {
        "color": ["red", "green", "blue", "yellow", "black"],   # 5 classes
        "shape": ["circle", "square", "triangle"],              # 3 classes
    }

    x = jax.random.normal(kx, (N, C, H, W), jnp.float32)
    params = init_params(kp, C, EMB, classes)

    # TODO(synk): real timm backbones (MobileNet/EfficientNet/ConvNext/ResNet/ViT)
    # have many conv/attention blocks; a single pointwise-conv + ReLU + GAP stand-in
    # reproduces the (N, emb_size) embedding interface deterministically.
    fused = prepare_fused_params(params, classes)    # one-time, hoisted out of forward

    out = multilabel_model_forward(x, fused)
    out = jax.tree_util.tree_map(jax.block_until_ready, out)

    # Sanity: dict keys and per-target logit shapes match the PyTorch module.
    assert set(out.keys()) == set(classes.keys())
    for name, labels in classes.items():
        assert out[name].shape == (N, len(labels)), (name, out[name].shape)

    # Numeric sanity vs. a pure-JAX f32 reference (bf16 MXU -> loose tolerance).
    xf = jnp.transpose(x, (0, 2, 3, 1)).reshape(N, H * W, C)
    yf = jnp.maximum(jnp.einsum("nsc,ce->nse", xf, params["conv_w"]) + params["conv_b"], 0.0)
    emb_ref = jnp.mean(yf, axis=1)
    for name in classes:
        ref = emb_ref @ params["heads"][name]["w"] + params["heads"][name]["b"]
        assert jnp.allclose(out[name], ref, atol=1e-2, rtol=5e-2), name

    print("KERNEL_OK")
</pallas_src>

<mosaic_0001>
module attributes {stable_mosaic.version = 11 : i64} {
  func.func @kernel(%arg0: i32, %arg1: i32, %arg2: memref<8x4x256xf32, #tpu.memory_space<vmem>>, %arg3: memref<4x128xbf16, #tpu.memory_space<vmem>>, %arg4: memref<1x128xf32, #tpu.memory_space<vmem>>, %arg5: memref<128x128xbf16, #tpu.memory_space<vmem>>, %arg6: memref<1x128xf32, #tpu.memory_space<vmem>>, %arg7: memref<8x128xf32, #tpu.memory_space<vmem>>, %arg8: memref<8x128xf32, #tpu.memory_space<vmem>>) attributes {dimension_semantics = [#tpu.dimension_semantics<parallel>, #tpu.dimension_semantics<arbitrary>], iteration_bounds = array<i64: 1, 1>, scalar_prefetch = 0 : i64, scratch_operands = 1 : i64, tpu.core_type = #tpu.core_type<tc>, window_params = [{transform_indices = @transform_0, window_bounds = array<i64: 8, 4, 256>}, {pipeline_mode = #tpu.pipeline_mode<synchronous>, transform_indices = @transform_1, window_bounds = array<i64: 4, 128>}, {pipeline_mode = #tpu.pipeline_mode<synchronous>, transform_indices = @transform_2, window_bounds = array<i64: 1, 128>}, {pipeline_mode = #tpu.pipeline_mode<synchronous>, transform_indices = @transform_3, window_bounds = array<i64: 128, 128>}, {pipeline_mode = #tpu.pipeline_mode<synchronous>, transform_indices = @transform_4, window_bounds = array<i64: 1, 128>}, {transform_indices = @transform_5, window_bounds = array<i64: 8, 128>}]} {
    %c0_i32 = arith.constant 0 : i32
    %0 = arith.cmpi eq, %arg1, %c0_i32 : i32
    %1 = arith.extui %0 : i1 to i32
    %c0_i32_0 = arith.constant 0 : i32
    %2 = arith.cmpi ne, %1, %c0_i32_0 : i32
    scf.if %2 {
      %cst_15 = arith.constant 0.000000e+00 : f32
      %22 = vector.broadcast %cst_15 : f32 to vector<8x128xf32>
      %c0_16 = arith.constant 0 : index
      %c0_17 = arith.constant 0 : index
      %23 = vector.load %arg8[%c0_16, %c0_17] : memref<8x128xf32, #tpu.memory_space<vmem>>, vector<8x128xf32>
      tpu.vector_store %arg8[%c0_16, %c0_17], %22 {strides = array<i32>} : memref<8x128xf32, #tpu.memory_space<vmem>>, vector<8x128xf32>,
    } else {
    }
    %c0 = arith.constant 0 : index
    %c0_1 = arith.constant 0 : index
    %c0_2 = arith.constant 0 : index
    %3 = vector.load %arg2[%c0, %c0_1, %c0_2] : memref<8x4x256xf32, #tpu.memory_space<vmem>>, vector<8x4x256xf32>
    %4 = tpu.transpose %3, [0, 2, 1] : vector<8x4x256xf32> -> vector<8x256x4xf32>
    %5 = vector.shape_cast %4 : vector<8x256x4xf32> to vector<2048x4xf32>
    %6 = arith.truncf %5 : vector<2048x4xf32> to vector<2048x4xbf16>
    %c0_3 = arith.constant 0 : index
    %c0_4 = arith.constant 0 : index
    %7 = vector.load %arg3[%c0_3, %c0_4] : memref<4x128xbf16, #tpu.memory_space<vmem>>, vector<4x128xbf16>
    %cst = arith.constant dense<0.000000e+00> : vector<2048x128xf32>
    %8 = tpu.matmul %6, %7, %cst {dimension_numbers = #tpu.dot_dimension_numbers<[1], [0], [0], [1], [0, 0, 1, 1], [], []>} : vector<2048x4xbf16>, vector<4x128xbf16>, vector<2048x128xf32> -> vector<2048x128xf32>
    %c0_5 = arith.constant 0 : index
    %c0_6 = arith.constant 0 : index
    %9 = vector.load %arg4[%c0_5, %c0_6] : memref<1x128xf32, #tpu.memory_space<vmem>>, vector<1x128xf32>
    %10 = vector.broadcast %9 : vector<1x128xf32> to vector<2048x128xf32>
    %11 = arith.addf %8, %10 : vector<2048x128xf32>
    %cst_7 = arith.constant 0.000000e+00 : f32
    %12 = vector.broadcast %cst_7 : f32 to vector<2048x128xf32>
    %13 = arith.maximumf %11, %12 : vector<2048x128xf32>
    %14 = vector.shape_cast %13 : vector<2048x128xf32> to vector<8x256x128xf32>
    %cst_8 = arith.constant dense<0.000000e+00> : vector<8x128xf32>
    %15 = vector.multi_reduction <add>, %14, %cst_8 [1] : vector<8x256x128xf32> to vector<8x128xf32>
    %c0_9 = arith.constant 0 : index
    %c0_10 = arith.constant 0 : index
    %16 = vector.load %arg8[%c0_9, %c0_10] : memref<8x128xf32, #tpu.memory_space<vmem>>, vector<8x128xf32>
    %17 = arith.addf %16, %15 : vector<8x128xf32>
    %c0_11 = arith.constant 0 : index
    %c0_12 = arith.constant 0 : index
    %18 = vector.load %arg8[%c0_11, %c0_12] : memref<8x128xf32, #tpu.memory_space<vmem>>, vector<8x128xf32>
    tpu.vector_store %arg8[%c0_11, %c0_12], %17 {strides = array<i32>} : memref<8x128xf32, #tpu.memory_space<vmem>>, vector<8x128xf32>,
    %c0_i32_13 = arith.constant 0 : i32
    %19 = arith.cmpi eq, %arg1, %c0_i32_13 : i32
    %20 = arith.extui %19 : i1 to i32
    %c0_i32_14 = arith.constant 0 : i32
    %21 = arith.cmpi ne, %20, %c0_i32_14 : i32
    scf.if %21 {
      %c0_15 = arith.constant 0 : index
      %c0_16 = arith.constant 0 : index
      %22 = vector.load %arg8[%c0_15, %c0_16] : memref<8x128xf32, #tpu.memory_space<vmem>>, vector<8x128xf32>
      %cst_17 = arith.constant 3.906250e-03 : f32
      %23 = vector.broadcast %cst_17 : f32 to vector<8x128xf32>
      %24 = arith.mulf %22, %23 : vector<8x128xf32>
      %25 = arith.truncf %24 : vector<8x128xf32> to vector<8x128xbf16>
      %c0_18 = arith.constant 0 : index
      %c0_19 = arith.constant 0 : index
      %26 = vector.load %arg5[%c0_18, %c0_19] : memref<128x128xbf16, #tpu.memory_space<vmem>>, vector<128x128xbf16>
      %cst_20 = arith.constant dense<0.000000e+00> : vector<8x128xf32>
      %27 = tpu.matmul %25, %26, %cst_20 {dimension_numbers = #tpu.dot_dimension_numbers<[1], [0], [0], [1], [0, 0, 1, 1], [], []>} : vector<8x128xbf16>, vector<128x128xbf16>, vector<8x128xf32> -> vector<8x128xf32>
      %c0_21 = arith.constant 0 : index
      %c0_22 = arith.constant 0 : index
      %28 = vector.load %arg6[%c0_21, %c0_22] : memref<1x128xf32, #tpu.memory_space<vmem>>, vector<1x128xf32>
      %29 = vector.broadcast %28 : vector<1x128xf32> to vector<8x128xf32>
      %30 = arith.addf %27, %29 : vector<8x128xf32>
      %c0_23 = arith.constant 0 : index
      %c0_24 = arith.constant 0 : index
      %31 = vector.load %arg7[%c0_23, %c0_24] : memref<8x128xf32, #tpu.memory_space<vmem>>, vector<8x128xf32>
      tpu.vector_store %arg7[%c0_23, %c0_24], %30 {strides = array<i32>} : memref<8x128xf32, #tpu.memory_space<vmem>>, vector<8x128xf32>,
    } else {
    }
    return
  }
  func.func @transform_0(%arg0: i32, %arg1: i32) -> (i32, i32, i32) {
    %c0_i32 = arith.constant 0 : i32
    %c0_i32_0 = arith.constant 0 : i32
    return %arg0, %c0_i32, %arg1 : i32, i32, i32
  }
  func.func @transform_1(%arg0: i32, %arg1: i32) -> (i32, i32) {
    %c0_i32 = arith.constant 0 : i32
    %c0_i32_0 = arith.constant 0 : i32
    %c0_i32_1 = arith.constant 0 : i32
    return %c0_i32, %c0_i32_0 : i32, i32
  }
  func.func @transform_2(%arg0: i32, %arg1: i32) -> (i32, i32) {
    %c0_i32 = arith.constant 0 : i32
    %c0_i32_0 = arith.constant 0 : i32
    %c0_i32_1 = arith.constant 0 : i32
    return %c0_i32, %c0_i32_0 : i32, i32
  }
  func.func @transform_3(%arg0: i32, %arg1: i32) -> (i32, i32) {
    %c0_i32 = arith.constant 0 : i32
    %c0_i32_0 = arith.constant 0 : i32
    %c0_i32_1 = arith.constant 0 : i32
    return %c0_i32, %c0_i32_0 : i32, i32
  }
  func.func @transform_4(%arg0: i32, %arg1: i32) -> (i32, i32) {
    %c0_i32 = arith.constant 0 : i32
    %c0_i32_0 = arith.constant 0 : i32
    %c0_i32_1 = arith.constant 0 : i32
    return %c0_i32, %c0_i32_0 : i32, i32
  }
  func.func @transform_5(%arg0: i32, %arg1: i32) -> (i32, i32) {
    %c0_i32 = arith.constant 0 : i32
    %c0_i32_0 = arith.constant 0 : i32
    return %arg0, %c0_i32 : i32, i32
  }
}

</mosaic_0001>

<llo_original>
// kernel: tpu_custom_call.1
$region0: #{tpu_custom_call.1}
  #allocation0 [shape = 'u32[]', space=smem, size = 0x4, offset = 0x4, fixed_abs, tag = 'smem constant byte address 0x4 - core index']
  #allocation1 [shape = 'u32[144,128]{1,0:T(1,128)}', space=vmem, size = 0x12000, scoped, tag = 'internal scratch']
  #allocation2 [shape = 'f32[8,128]{1,0:T(8,128)}', space=vmem, size = 0x1000, scoped, tag = 'scratch operand']
  %s0 = inlined_call_operand.hbm [shape: f32[8,4,256], index: 0, kind: input, shape index: {}]
  %s1 = inlined_call_operand.hbm [shape: bf16[4,128], index: 1, kind: input, shape index: {}]
  %s2 = inlined_call_operand.hbm [shape: f32[1,128], index: 2, kind: input, shape index: {}]
  %s3 = inlined_call_operand.hbm [shape: bf16[128,128], index: 3, kind: input, shape index: {}]
  %s4 = inlined_call_operand.hbm [shape: f32[1,128], index: 4, kind: input, shape index: {}]
  %s5 = inlined_call_operand.hbm [shape: f32[8,128], index: 5, kind: output, shape index: {}]
  %s6 = sld [smem:[#allocation0]]
  $region58: #{tpu_custom_call.1} parent=0
    _
  %s8 = ssub.s32 1, %s6
  %s9 = scalar_select 0, %s8, %s6
  $region1: #{tpu_custom_call.1} parent=0
    #allocation3 [shape = 'u8[32768]{0}', space=vmem, size = 0x8000, scoped, tag = 'input window, operand 0, single buffered']
    #allocation4 [shape = 's32[1]{0}', space=sflag, size = 0x4, scoped, tag = 'scoped memory for tpu_custom_call.1']
    #allocation5 [shape = 's32[1]{0}', space=sflag, size = 0x4, scoped, tag = 'scoped memory for tpu_custom_call.1']
    #allocation6 [shape = 'u8[1024]{0}', space=vmem, size = 0x400, scoped, tag = 'input window, operand 1, single buffered']
    #allocation7 [shape = 's32[1]{0}', space=sflag, size = 0x4, scoped, tag = 'scoped memory for tpu_custom_call.1']
    #allocation8 [shape = 'u8[512]{0}', space=vmem, size = 0x400, scoped, tag = 'input window, operand 2, single buffered']
    #allocation9 [shape = 'u8[32768]{0}', space=vmem, size = 0x8000, scoped, tag = 'input window, operand 3, single buffered']
    #allocation10 [shape = 's32[1]{0}', space=sflag, size = 0x4, scoped, tag = 'scoped memory for tpu_custom_call.1']
    #allocation11 [shape = 'u8[512]{0}', space=vmem, size = 0x400, scoped, tag = 'input window, operand 4, single buffered']
    #allocation12 [shape = 'u8[4096]{0}', space=vmem, size = 0x1000, scoped, tag = 'output window, operand 0, single buffered']
    %10 = vsyncpa [#allocation4], 0
    %11 = vsyncpa [#allocation7], 0
    %12 = vsyncpa [#allocation10], 0
    %13 = vsyncpa [#allocation5], 0
    // Predicated region
    $region2: #{tpu_custom_call.1} parent=1 // pred_check
      _
    $region3: #{tpu_custom_call.1} parent=1 // pred_check_branch
      %15 = sbr.rel (0) target = $region5
    $region4: #{tpu_custom_call.1} parent=1 // pred_region
      %s17 = ssub.s32 1024, 1024
      %18 = vsyncadd [#allocation4], %s17
      %s19 = sshll.u32 [#allocation3], 4
      %s20 = int_to_ptr.vmem [resolvable:$true] %s19
      %25 = dma.hbm_to_vmem [thread:$0]  %s0, 1024, %s20, [#allocation4], 128, 128, 8
    $region5: #{tpu_custom_call.1} parent=1 // pred_fallthru
      _
    // Predicated region
    $region6: #{tpu_custom_call.1} parent=1 // pred_check
      _
    $region7: #{tpu_custom_call.1} parent=1 // pred_check_branch
      %27 = sbr.rel (0) target = $region9
    $region8: #{tpu_custom_call.1} parent=1 // pred_region
      %s29 = ssub.s32 32, 32
      %30 = vsyncadd [#allocation7], %s29
      %s32 = sshll.u32 [#allocation6], 4
      %s33 = int_to_ptr.vmem [resolvable:$true] %s32
      %35 = dma.hbm_to_vmem [thread:$0]  %s1, 32, %s33, [#allocation7]
    $region9: #{tpu_custom_call.1} parent=1 // pred_fallthru
      _
    // Predicated region
    $region10: #{tpu_custom_call.1} parent=1 // pred_check
      _
    $region11: #{tpu_custom_call.1} parent=1 // pred_check_branch
      %37 = sbr.rel (0) target = $region13
    $region12: #{tpu_custom_call.1} parent=1 // pred_region
      %s39 = ssub.s32 16, 16
      %40 = vsyncadd [#allocation7], %s39
      %s42 = sshll.u32 [#allocation8], 4
      %s43 = int_to_ptr.vmem [resolvable:$true] %s42
      %45 = dma.hbm_to_vmem [thread:$0]  %s2, 16, %s43, [#allocation7]
    $region13: #{tpu_custom_call.1} parent=1 // pred_fallthru
      _
    // Predicated region
    $region14: #{tpu_custom_call.1} parent=1 // pred_check
      _
    $region15: #{tpu_custom_call.1} parent=1 // pred_check_branch
      %47 = sbr.rel (0) target = $region17
    $region16: #{tpu_custom_call.1} parent=1 // pred_region
      %s49 = ssub.s32 1024, 1024
      %50 = vsyncadd [#allocation10], %s49
      %s51 = sshll.u32 [#allocation9], 4
      %s52 = int_to_ptr.vmem [resolvable:$true] %s51
      %57 = dma.hbm_to_vmem [thread:$0]  %s3, 1024, %s52, [#allocation10], 64, 64, 4
    $region17: #{tpu_custom_call.1} parent=1 // pred_fallthru
      _
    // Predicated region
    $region18: #{tpu_custom_call.1} parent=1 // pred_check
      _
    $region19: #{tpu_custom_call.1} parent=1 // pred_check_branch
      %59 = sbr.rel (0) target = $region21
    $region20: #{tpu_custom_call.1} parent=1 // pred_region
      %s61 = ssub.s32 16, 16
      %62 = vsyncadd [#allocation10], %s61
      %s64 = sshll.u32 [#allocation11], 4
      %s65 = int_to_ptr.vmem [resolvable:$true] %s64
      %67 = dma.hbm_to_vmem [thread:$0]  %s4, 16, %s65, [#allocation10]
    $region21: #{tpu_custom_call.1} parent=1 // pred_fallthru
      _
    // Predicated region
    $region22: #{tpu_custom_call.1} parent=1 // pred_check
      _
    $region23: #{tpu_custom_call.1} parent=1 // pred_check_branch
      %69 = sbr.rel (0) target = $region25
    $region24: #{tpu_custom_call.1} parent=1 // pred_region
      %70 = dma.done [#allocation4], 1024
    $region25: #{tpu_custom_call.1} parent=1 // pred_fallthru
      _
    // Predicated region
    $region26: #{tpu_custom_call.1} parent=1 // pred_check
      _
    $region27: #{tpu_custom_call.1} parent=1 // pred_check_branch
      %72 = sbr.rel (0) target = $region29
    $region28: #{tpu_custom_call.1} parent=1 // pred_region
      %73 = dma.done [#allocation7], 32
    $region29: #{tpu_custom_call.1} parent=1 // pred_fallthru
      _
    // Predicated region
    $region30: #{tpu_custom_call.1} parent=1 // pred_check
      _
    $region31: #{tpu_custom_call.1} parent=1 // pred_check_branch
      %75 = sbr.rel (0) target = $region33
    $region32: #{tpu_custom_call.1} parent=1 // pred_region
      %76 = dma.done [#allocation7], 16
    $region33: #{tpu_custom_call.1} parent=1 // pred_fallthru
      _
    // Predicated region
    $region34: #{tpu_custom_call.1} parent=1 // pred_check
      _
    $region35: #{tpu_custom_call.1} parent=1 // pred_check_branch
      %78 = sbr.rel (0) target = $region37
    $region36: #{tpu_custom_call.1} parent=1 // pred_region
      %79 = dma.done [#allocation10], 1024
    $region37: #{tpu_custom_call.1} parent=1 // pred_fallthru
      _
    // Predicated region
    $region38: #{tpu_custom_call.1} parent=1 // pred_check
      _
    $region39: #{tpu_custom_call.1} parent=1 // pred_check_branch
      %81 = sbr.rel (0) target = $region41
    $region40: #{tpu_custom_call.1} parent=1 // pred_region
      %82 = dma.done [#allocation10], 16
    $region41: #{tpu_custom_call.1} parent=1 // pred_fallthru
      _
    %p84 = scmp.eq.s32.totalorder 0, 0
    // Predicated region
    $region42: #{tpu_custom_call.1} parent=1 // pred_check
      %p85 = pneg %p84
    $region43: #{tpu_custom_call.1} parent=1 // pred_check_branch
      %87 = sbr.rel (%p85) target = $region45
    $region44: #{tpu_custom_call.1} parent=1 // pred_region
      %88 = vst [vmem:[#allocation2] sm:$0xff] 0.0
    $region45: #{tpu_custom_call.1} parent=1 // pred_fallthru
      _
    %v89 = vld [vmem:[#allocation3] sm:$0xff]
    %v90 = vld [vmem:[#allocation3 + $0x8] sm:$0xff]
    %v91 = vld [vmem:[#allocation3 + $0x10] sm:$0xff]
    %v92 = vld [vmem:[#allocation3 + $0x18] sm:$0xff]
    %v93 = vld [vmem:[#allocation3 + $0x20] sm:$0xff]
    %v94 = vld [vmem:[#allocation3 + $0x28] sm:$0xff]
    %v95 = vld [vmem:[#allocation3 + $0x30] sm:$0xff]
    %v96 = vld [vmem:[#allocation3 + $0x38] sm:$0xff]
    %v105 = vcombine.high %v89, %v89
    %v106 = vcombine.high %v90, %v90
    %v107 = vcombine.high %v91, %v91
    %v108 = vcombine.high %v92, %v92
    %v109 = vcombine.high %v93, %v93
    %v110 = vcombine.high %v94, %v94
    %v111 = vcombine.high %v95, %v95
    %v112 = vcombine.high %v96, %v96
    %121 = vxpose.xlu0.b32.start [1/16] %v89, 128
    %122 = vxpose.xlu0.b32.cont [2/16] 0.0, 128
    %123 = vxpose.xlu0.b32.cont [3/16] 0.0, 128
    %124 = vxpose.xlu0.b32.cont [4/16] 0.0, 128
    %125 = vxpose.xlu0.b32.cont [5/16] 0.0, 128
    %126 = vxpose.xlu0.b32.cont [6/16] 0.0, 128
    %127 = vxpose.xlu0.b32.cont [7/16] 0.0, 128
    %128 = vxpose.xlu0.b32.cont [8/16] 0.0, 128
    %129 = vxpose.xlu0.b32.cont [9/16] 0.0, 128
    %130 = vxpose.xlu0.b32.cont [10/16] 0.0, 128
    %131 = vxpose.xlu0.b32.cont [11/16] 0.0, 128
    %132 = vxpose.xlu0.b32.cont [12/16] 0.0, 128
    %133 = vxpose.xlu0.b32.cont [13/16] 0.0, 128
    %134 = vxpose.xlu0.b32.cont [14/16] 0.0, 128
    %135 = vxpose.xlu0.b32.cont [15/16] 0.0, 128
    %136 = vxpose.xlu0.b32.end [16/16] 0.0, 128
    %v137 = vpop.trf.xlu0
    %v138 = vpop.trf.xlu0
    %v139 = vpop.trf.xlu0
    %v140 = vpop.trf.xlu0
    %v141 = vpop.trf.xlu0
    %v142 = vpop.trf.xlu0
    %v143 = vpop.trf.xlu0
    %v144 = vpop.trf.xlu0
    %v145 = vpop.trf.xlu0
    %v146 = vpop.trf.xlu0
    %v147 = vpop.trf.xlu0
    %v148 = vpop.trf.xlu0
    %v149 = vpop.trf.xlu0
    %v150 = vpop.trf.xlu0
    %v151 = vpop.trf.xlu0
    %v152 = vpop.trf.xlu0
    %153 = vxpose.xlu0.b32.start [1/16] %v105, 128
    %154 = vxpose.xlu0.b32.cont [2/16] 0.0, 128
    %155 = vxpose.xlu0.b32.cont [3/16] 0.0, 128
    %156 = vxpose.xlu0.b32.cont [4/16] 0.0, 128
    %157 = vxpose.xlu0.b32.cont [5/16] 0.0, 128
    %158 = vxpose.xlu0.b32.cont [6/16] 0.0, 128
    %159 = vxpose.xlu0.b32.cont [7/16] 0.0, 128
    %160 = vxpose.xlu0.b32.cont [8/16] 0.0, 128
    %161 = vxpose.xlu0.b32.cont [9/16] 0.0, 128
    %162 = vxpose.xlu0.b32.cont [10/16] 0.0, 128
    %163 = vxpose.xlu0.b32.cont [11/16] 0.0, 128
    %164 = vxpose.xlu0.b32.cont [12/16] 0.0, 128
    %165 = vxpose.xlu0.b32.cont [13/16] 0.0, 128
    %166 = vxpose.xlu0.b32.cont [14/16] 0.0, 128
    %167 = vxpose.xlu0.b32.cont [15/16] 0.0, 128
    %168 = vxpose.xlu0.b32.end [16/16] 0.0, 128
    %v169 = vpop.trf.xlu0
    %v170 = vpop.trf.xlu0
    %v171 = vpop.trf.xlu0
    %v172 = vpop.trf.xlu0
    %v173 = vpop.trf.xlu0
    %v174 = vpop.trf.xlu0
    %v175 = vpop.trf.xlu0
    %v176 = vpop.trf.xlu0
    %v177 = vpop.trf.xlu0
    %v178 = vpop.trf.xlu0
    %v179 = vpop.trf.xlu0
    %v180 = vpop.trf.xlu0
    %v181 = vpop.trf.xlu0
    %v182 = vpop.trf.xlu0
    %v183 = vpop.trf.xlu0
    %v184 = vpop.trf.xlu0
    %185 = vxpose.xlu0.b32.start [1/16] %v90, 128
    %186 = vxpose.xlu0.b32.cont [2/16] 0.0, 128
    %187 = vxpose.xlu0.b32.cont [3/16] 0.0, 128
    %188 = vxpose.xlu0.b32.cont [4/16] 0.0, 128
    %189 = vxpose.xlu0.b32.cont [5/16] 0.0, 128
    %190 = vxpose.xlu0.b32.cont [6/16] 0.0, 128
    %191 = vxpose.xlu0.b32.cont [7/16] 0.0, 128
    %192 = vxpose.xlu0.b32.cont [8/16] 0.0, 128
    %193 = vxpose.xlu0.b32.cont [9/16] 0.0, 128
    %194 = vxpose.xlu0.b32.cont [10/16] 0.0, 128
    %195 = vxpose.xlu0.b32.cont [11/16] 0.0, 128
    %196 = vxpose.xlu0.b32.cont [12/16] 0.0, 128
    %197 = vxpose.xlu0.b32.cont [13/16] 0.0, 128
    %198 = vxpose.xlu0.b32.cont [14/16] 0.0, 128
    %199 = vxpose.xlu0.b32.cont [15/16] 0.0, 128
    %200 = vxpose.xlu0.b32.end [16/16] 0.0, 128
    %v201 = vpop.trf.xlu0
    %v202 = vpop.trf.xlu0
    %v203 = vpop.trf.xlu0
    %v204 = vpop.trf.xlu0
    %v205 = vpop.trf.xlu0
    %v206 = vpop.trf.xlu0
    %v207 = vpop.trf.xlu0
    %v208 = vpop.trf.xlu0
    %v209 = vpop.trf.xlu0
    %v210 = vpop.trf.xlu0
    %v211 = vpop.trf.xlu0
    %v212 = vpop.trf.xlu0
    %v213 = vpop.trf.xlu0
    %v214 = vpop.trf.xlu0
    %v215 = vpop.trf.xlu0
    %v216 = vpop.trf.xlu0
    %217 = vxpose.xlu0.b32.start [1/16] %v106, 128
    %218 = vxpose.xlu0.b32.cont [2/16] 0.0, 128
    %219 = vxpose.xlu0.b32.cont [3/16] 0.0, 128
    %220 = vxpose.xlu0.b32.cont [4/16] 0.0, 128
    %221 = vxpose.xlu0.b32.cont [5/16] 0.0, 128
    %222 = vxpose.xlu0.b32.cont [6/16] 0.0, 128
    %223 = vxpose.xlu0.b32.cont [7/16] 0.0, 128
    %224 = vxpose.xlu0.b32.cont [8/16] 0.0, 128
    %225 = vxpose.xlu0.b32.cont [9/16] 0.0, 128
    %226 = vxpose.xlu0.b32.cont [10/16] 0.0, 128
    %227 = vxpose.xlu0.b32.cont [11/16] 0.0, 128
    %228 = vxpose.xlu0.b32.cont [12/16] 0.0, 128
    %229 = vxpose.xlu0.b32.cont [13/16] 0.0, 128
    %230 = vxpose.xlu0.b32.cont [14/16] 0.0, 128
    %231 = vxpose.xlu0.b32.cont [15/16] 0.0, 128
    %232 = vxpose.xlu0.b32.end [16/16] 0.0, 128
    %v233 = vpop.trf.xlu0
    %v234 = vpop.trf.xlu0
    %v235 = vpop.trf.xlu0
    %v236 = vpop.trf.xlu0
    %v237 = vpop.trf.xlu0
    %v238 = vpop.trf.xlu0
    %v239 = vpop.trf.xlu0
    %v240 = vpop.trf.xlu0
    %v241 = vpop.trf.xlu0
    %v242 = vpop.trf.xlu0
    %v243 = vpop.trf.xlu0
    %v244 = vpop.trf.xlu0
    %v245 = vpop.trf.xlu0
    %v246 = vpop.trf.xlu0
    %v247 = vpop.trf.xlu0
    %v248 = vpop.trf.xlu0
    %249 = vxpose.xlu0.b32.start [1/16] %v91, 128
    %250 = vxpose.xlu0.b32.cont [2/16] 0.0, 128
    %251 = vxpose.xlu0.b32.cont [3/16] 0.0, 128
    %252 = vxpose.xlu0.b32.cont [4/16] 0.0, 128
    %253 = vxpose.xlu0.b32.cont [5/16] 0.0, 128
    %254 = vxpose.xlu0.b32.cont [6/16] 0.0, 128
    %255 = vxpose.xlu0.b32.cont [7/16] 0.0, 128
    %256 = vxpose.xlu0.b32.cont [8/16] 0.0, 128
    %257 = vxpose.xlu0.b32.cont [9/16] 0.0, 128
    %258 = vxpose.xlu0.b32.cont [10/16] 0.0, 128
    %259 = vxpose.xlu0.b32.cont [11/16] 0.0, 128
    %260 = vxpose.xlu0.b32.cont [12/16] 0.0, 128
    %261 = vxpose.xlu0.b32.cont [13/16] 0.0, 128
    %262 = vxpose.xlu0.b32.cont [14/16] 0.0, 128
    %263 = vxpose.xlu0.b32.cont [15/16] 0.0, 128
    %264 = vxpose.xlu0.b32.end [16/16] 0.0, 128
    %v265 = vpop.trf.xlu0
    %v266 = vpop.trf.xlu0
    %v267 = vpop.trf.xlu0
    %v268 = vpop.trf.xlu0
    %v269 = vpop.trf.xlu0
    %v270 = vpop.trf.xlu0
    %v271 = vpop.trf.xlu0
    %v272 = vpop.trf.xlu0
    %v273 = vpop.trf.xlu0
    %v274 = vpop.trf.xlu0
    %v275 = vpop.trf.xlu0
    %v276 = vpop.trf.xlu0
    %v277 = vpop.trf.xlu0
    %v278 = vpop.trf.xlu0
    %v279 = vpop.trf.xlu0
    %v280 = vpop.trf.xlu0
    %281 = vxpose.xlu0.b32.start [1/16] %v107, 128
    %282 = vxpose.xlu0.b32.cont [2/16] 0.0, 128
    %283 = vxpose.xlu0.b32.cont [3/16] 0.0, 128
    %284 = vxpose.xlu0.b32.cont [4/16] 0.0, 128
    %285 = vxpose.xlu0.b32.cont [5/16] 0.0, 128
    %286 = vxpose.xlu0.b32.cont [6/16] 0.0, 128
    %287 = vxpose.xlu0.b32.cont [7/16] 0.0, 128
    %288 = vxpose.xlu0.b32.cont [8/16] 0.0, 128
    %289 = vxpose.xlu0.b32.cont [9/16] 0.0, 128
    %290 = vxpose.xlu0.b32.cont [10/16] 0.0, 128
    %291 = vxpose.xlu0.b32.cont [11/16] 0.0, 128
    %292 = vxpose.xlu0.b32.cont [12/16] 0.0, 128
    %293 = vxpose.xlu0.b32.cont [13/16] 0.0, 128
    %294 = vxpose.xlu0.b32.cont [14/16] 0.0, 128
    %295 = vxpose.xlu0.b32.cont [15/16] 0.0, 128
    %296 = vxpose.xlu0.b32.end [16/16] 0.0, 128
    %v297 = vpop.trf.xlu0
    %v298 = vpop.trf.xlu0
    %v299 = vpop.trf.xlu0
    %v300 = vpop.trf.xlu0
    %v301 = vpop.trf.xlu0
    %v302 = vpop.trf.xlu0
    %v303 = vpop.trf.xlu0
    %v304 = vpop.trf.xlu0
    %v305 = vpop.trf.xlu0
    %v306 = vpop.trf.xlu0
    %v307 = vpop.trf.xlu0
    %v308 = vpop.trf.xlu0
    %v309 = vpop.trf.xlu0
    %v310 = vpop.trf.xlu0
    %v311 = vpop.trf.xlu0
    %v312 = vpop.trf.xlu0
    %313 = vxpose.xlu0.b32.start [1/16] %v92, 128
    %314 = vxpose.xlu0.b32.cont [2/16] 0.0, 128
    %315 = vxpose.xlu0.b32.cont [3/16] 0.0, 128
    %316 = vxpose.xlu0.b32.cont [4/16] 0.0, 128
    %317 = vxpose.xlu0.b32.cont [5/16] 0.0, 128
    %318 = vxpose.xlu0.b32.cont [6/16] 0.0, 128
    %319 = vxpose.xlu0.b32.cont [7/16] 0.0, 128
    %320 = vxpose.xlu0.b32.cont [8/16] 0.0, 128
    %321 = vxpose.xlu0.b32.cont [9/16] 0.0, 128
    %322 = vxpose.xlu0.b32.cont [10/16] 0.0, 128
    %323 = vxpose.xlu0.b32.cont [11/16] 0.0, 128
    %324 = vxpose.xlu0.b32.cont [12/16] 0.0, 128
    %325 = vxpose.xlu0.b32.cont [13/16] 0.0, 128
    %326 = vxpose.xlu0.b32.cont [14/16] 0.0, 128
    %327 = vxpose.xlu0.b32.cont [15/16] 0.0, 128
    %328 = vxpose.xlu0.b32.end [16/16] 0.0, 128
    %v329 = vpop.trf.xlu0
    %v330 = vpop.trf.xlu0
    %v331 = vpop.trf.xlu0
    %v332 = vpop.trf.xlu0
    %v333 = vpop.trf.xlu0
    %v334 = vpop.trf.xlu0
    %v335 = vpop.trf.xlu0
    %v336 = vpop.trf.xlu0
    %v337 = vpop.trf.xlu0
    %v338 = vpop.trf.xlu0
    %v339 = vpop.trf.xlu0
    %v340 = vpop.trf.xlu0
    %v341 = vpop.trf.xlu0
    %v342 = vpop.trf.xlu0
    %v343 = vpop.trf.xlu0
    %v344 = vpop.trf.xlu0
    %345 = vxpose.xlu0.b32.start [1/16] %v108, 128
    %346 = vxpose.xlu0.b32.cont [2/16] 0.0, 128
    %347 = vxpose.xlu0.b32.cont [3/16] 0.0, 128
    %348 = vxpose.xlu0.b32.cont [4/16] 0.0, 128
    %349 = vxpose.xlu0.b32.cont [5/16] 0.0, 128
    %350 = vxpose.xlu0.b32.cont [6/16] 0.0, 128
    %351 = vxpose.xlu0.b32.cont [7/16] 0.0, 128
    %352 = vxpose.xlu0.b32.cont [8/16] 0.0, 128
    %353 = vxpose.xlu0.b32.cont [9/16] 0.0, 128
    %354 = vxpose.xlu0.b32.cont [10/16] 0.0, 128
    %355 = vxpose.xlu0.b32.cont [11/16] 0.0, 128
    %356 = vxpose.xlu0.b32.cont [12/16] 0.0, 128
    %357 = vxpose.xlu0.b32.cont [13/16] 0.0, 128
    %358 = vxpose.xlu0.b32.cont [14/16] 0.0, 128
    %359 = vxpose.xlu0.b32.cont [15/16] 0.0, 128
    %360 = vxpose.xlu0.b32.end [16/16] 0.0, 128
    %v361 = vpop.trf.xlu0
    %v362 = vpop.trf.xlu0
    %v363 = vpop.trf.xlu0
    %v364 = vpop.trf.xlu0
    %v365 = vpop.trf.xlu0
    %v366 = vpop.trf.xlu0
    %v367 = vpop.trf.xlu0
    %v368 = vpop.trf.xlu0
    %v369 = vpop.trf.xlu0
    %v370 = vpop.trf.xlu0
    %v371 = vpop.trf.xlu0
    %v372 = vpop.trf.xlu0
    %v373 = vpop.trf.xlu0
    %v374 = vpop.trf.xlu0
    %v375 = vpop.trf.xlu0
    %v376 = vpop.trf.xlu0
    %377 = vxpose.xlu0.b32.start [1/16] %v93, 128
    %378 = vxpose.xlu0.b32.cont [2/16] 0.0, 128
    %379 = vxpose.xlu0.b32.cont [3/16] 0.0, 128
    %380 = vxpose.xlu0.b32.cont [4/16] 0.0, 128
    %381 = vxpose.xlu0.b32.cont [5/16] 0.0, 128
    %382 = vxpose.xlu0.b32.cont [6/16] 0.0, 128
    %383 = vxpose.xlu0.b32.cont [7/16] 0.0, 128
    %384 = vxpose.xlu0.b32.cont [8/16] 0.0, 128
    %385 = vxpose.xlu0.b32.cont [9/16] 0.0, 128
    %386 = vxpose.xlu0.b32.cont [10/16] 0.0, 128
    %387 = vxpose.xlu0.b32.cont [11/16] 0.0, 128
    %388 = vxpose.xlu0.b32.cont [12/16] 0.0, 128
    %389 = vxpose.xlu0.b32.cont [13/16] 0.0, 128
    %390 = vxpose.xlu0.b32.cont [14/16] 0.0, 128
    %391 = vxpose.xlu0.b32.cont [15/16] 0.0, 128
    %392 = vxpose.xlu0.b32.end [16/16] 0.0, 128
    %v393 = vpop.trf.xlu0
    %v394 = vpop.trf.xlu0
    %v395 = vpop.trf.xlu0
    %v396 = vpop.trf.xlu0
    %v397 = vpop.trf.xlu0
    %v398 = vpop.trf.xlu0
    %v399 = vpop.trf.xlu0
    %v400 = vpop.trf.xlu0
    %v401 = vpop.trf.xlu0
    %v402 = vpop.trf.xlu0
    %v403 = vpop.trf.xlu0
    %v404 = vpop.trf.xlu0
    %v405 = vpop.trf.xlu0
    %v406 = vpop.trf.xlu0
    %v407 = vpop.trf.xlu0
    %v408 = vpop.trf.xlu0
    %409 = vxpose.xlu0.b32.start [1/16] %v109, 128
    %410 = vxpose.xlu0.b32.cont [2/16] 0.0, 128
    %411 = vxpose.xlu0.b32.cont [3/16] 0.0, 128
    %412 = vxpose.xlu0.b32.cont [4/16] 0.0, 128
    %413 = vxpose.xlu0.b32.cont [5/16] 0.0, 128
    %414 = vxpose.xlu0.b32.cont [6/16] 0.0, 128
    %415 = vxpose.xlu0.b32.cont [7/16] 0.0, 128
    %416 = vxpose.xlu0.b32.cont [8/16] 0.0, 128
    %417 = vxpose.xlu0.b32.cont [9/16] 0.0, 128
    %418 = vxpose.xlu0.b32.cont [10/16] 0.0, 128
    %419 = vxpose.xlu0.b32.cont [11/16] 0.0, 128
    %420 = vxpose.xlu0.b32.cont [12/16] 0.0, 128
    %421 = vxpose.xlu0.b32.cont [13/16] 0.0, 128
    %422 = vxpose.xlu0.b32.cont [14/16] 0.0, 128
    %423 = vxpose.xlu0.b32.cont [15/16] 0.0, 128
    %424 = vxpose.xlu0.b32.end [16/16] 0.0, 128
    %v425 = vpop.trf.xlu0
    %v426 = vpop.trf.xlu0
    %v427 = vpop.trf.xlu0
    %v428 = vpop.trf.xlu0
    %v429 = vpop.trf.xlu0
    %v430 = vpop.trf.xlu0
    %v431 = vpop.trf.xlu0
    %v432 = vpop.trf.xlu0
    %v433 = vpop.trf.xlu0
    %v434 = vpop.trf.xlu0
    %v435 = vpop.trf.xlu0
    %v436 = vpop.trf.xlu0
    %v437 = vpop.trf.xlu0
    %v438 = vpop.trf.xlu0
    %v439 = vpop.trf.xlu0
    %v440 = vpop.trf.xlu0
    %441 = vxpose.xlu0.b32.start [1/16] %v94, 128
    %442 = vxpose.xlu0.b32.cont [2/16] 0.0, 128
    %443 = vxpose.xlu0.b32.cont [3/16] 0.0, 128
    %444 = vxpose.xlu0.b32.cont [4/16] 0.0, 128
    %445 = vxpose.xlu0.b32.cont [5/16] 0.0, 128
    %446 = vxpose.xlu0.b32.cont [6/16] 0.0, 128
    %447 = vxpose.xlu0.b32.cont [7/16] 0.0, 128
    %448 = vxpose.xlu0.b32.cont [8/16] 0.0, 128
    %449 = vxpose.xlu0.b32.cont [9/16] 0.0, 128
    %450 = vxpose.xlu0.b32.cont [10/16] 0.0, 128
    %451 = vxpose.xlu0.b32.cont [11/16] 0.0, 128
    %452 = vxpose.xlu0.b32.cont [12/16] 0.0, 128
    %453 = vxpose.xlu0.b32.cont [13/16] 0.0, 128
    %454 = vxpose.xlu0.b32.cont [14/16] 0.0, 128
    %455 = vxpose.xlu0.b32.cont [15/16] 0.0, 128
    %456 = vxpose.xlu0.b32.end [16/16] 0.0, 128
    %v457 = vpop.trf.xlu0
    %v458 = vpop.trf.xlu0
    %v459 = vpop.trf.xlu0
    %v460 = vpop.trf.xlu0
    %v461 = vpop.trf.xlu0
    %v462 = vpop.trf.xlu0
    %v463 = vpop.trf.xlu0
    %v464 = vpop.trf.xlu0
    %v465 = vpop.trf.xlu0
    %v466 = vpop.trf.xlu0
    %v467 = vpop.trf.xlu0
    %v468 = vpop.trf.xlu0
    %v469 = vpop.trf.xlu0
    %v470 = vpop.trf.xlu0
    %v471 = vpop.trf.xlu0
    %v472 = vpop.trf.xlu0
    %473 = vxpose.xlu0.b32.start [1/16] %v110, 128
    %474 = vxpose.xlu0.b32.cont [2/16] 0.0, 128
    %475 = vxpose.xlu0.b32.cont [3/16] 0.0, 128
    %476 = vxpose.xlu0.b32.cont [4/16] 0.0, 128
    %477 = vxpose.xlu0.b32.cont [5/16] 0.0, 128
    %478 = vxpose.xlu0.b32.cont [6/16] 0.0, 128
    %479 = vxpose.xlu0.b32.cont [7/16] 0.0, 128
    %480 = vxpose.xlu0.b32.cont [8/16] 0.0, 128
    %481 = vxpose.xlu0.b32.cont [9/16] 0.0, 128
    %482 = vxpose.xlu0.b32.cont [10/16] 0.0, 128
    %483 = vxpose.xlu0.b32.cont [11/16] 0.0, 128
    %484 = vxpose.xlu0.b32.cont [12/16] 0.0, 128
    %485 = vxpose.xlu0.b32.cont [13/16] 0.0, 128
    %486 = vxpose.xlu0.b32.cont [14/16] 0.0, 128
    %487 = vxpose.xlu0.b32.cont [15/16] 0.0, 128
    %488 = vxpose.xlu0.b32.end [16/16] 0.0, 128
    %v489 = vpop.trf.xlu0
    %v490 = vpop.trf.xlu0
    %v491 = vpop.trf.xlu0
    %v492 = vpop.trf.xlu0
    %v493 = vpop.trf.xlu0
    %v494 = vpop.trf.xlu0
    %v495 = vpop.trf.xlu0
    %v496 = vpop.trf.xlu0
    %v497 = vpop.trf.xlu0
    %v498 = vpop.trf.xlu0
    %v499 = vpop.trf.xlu0
    %v500 = vpop.trf.xlu0
    %v501 = vpop.trf.xlu0
    %v502 = vpop.trf.xlu0
    %v503 = vpop.trf.xlu0
    %v504 = vpop.trf.xlu0
    %505 = vxpose.xlu0.b32.start [1/16] %v95, 128
    %506 = vxpose.xlu0.b32.cont [2/16] 0.0, 128
    %507 = vxpose.xlu0.b32.cont [3/16] 0.0, 128
    %508 = vxpose.xlu0.b32.cont [4/16] 0.0, 128
    %509 = vxpose.xlu0.b32.cont [5/16] 0.0, 128
    %510 = vxpose.xlu0.b32.cont [6/16] 0.0, 128
    %511 = vxpose.xlu0.b32.cont [7/16] 0.0, 128
    %512 = vxpose.xlu0.b32.cont [8/16] 0.0, 128
    %513 = vxpose.xlu0.b32.cont [9/16] 0.0, 128
    %514 = vxpose.xlu0.b32.cont [10/16] 0.0, 128
    %515 = vxpose.xlu0.b32.cont [11/16] 0.0, 128
    %516 = vxpose.xlu0.b32.cont [12/16] 0.0, 128
    %517 = vxpose.xlu0.b32.cont [13/16] 0.0, 128
    %518 = vxpose.xlu0.b32.cont [14/16] 0.0, 128
    %519 = vxpose.xlu0.b32.cont [15/16] 0.0, 128
    %520 = vxpose.xlu0.b32.end [16/16] 0.0, 128
    %v521 = vpop.trf.xlu0
    %v522 = vpop.trf.xlu0
    %v523 = vpop.trf.xlu0
    %v524 = vpop.trf.xlu0
    %v525 = vpop.trf.xlu0
    %v526 = vpop.trf.xlu0
    %v527 = vpop.trf.xlu0
    %v528 = vpop.trf.xlu0
    %v529 = vpop.trf.xlu0
    %v530 = vpop.trf.xlu0
    %v531 = vpop.trf.xlu0
    %v532 = vpop.trf.xlu0
    %v533 = vpop.trf.xlu0
    %v534 = vpop.trf.xlu0
    %v535 = vpop.trf.xlu0
    %v536 = vpop.trf.xlu0
    %537 = vxpose.xlu0.b32.start [1/16] %v111, 128
    %538 = vxpose.xlu0.b32.cont [2/16] 0.0, 128
    %539 = vxpose.xlu0.b32.cont [3/16] 0.0, 128
    %540 = vxpose.xlu0.b32.cont [4/16] 0.0, 128
    %541 = vxpose.xlu0.b32.cont [5/16] 0.0, 128
    %542 = vxpose.xlu0.b32.cont [6/16] 0.0, 128
    %543 = vxpose.xlu0.b32.cont [7/16] 0.0, 128
    %544 = vxpose.xlu0.b32.cont [8/16] 0.0, 128
    %545 = vxpose.xlu0.b32.cont [9/16] 0.0, 128
    %546 = vxpose.xlu0.b32.cont [10/16] 0.0, 128
    %547 = vxpose.xlu0.b32.cont [11/16] 0.0, 128
    %548 = vxpose.xlu0.b32.cont [12/16] 0.0, 128
    %549 = vxpose.xlu0.b32.cont [13/16] 0.0, 128
    %550 = vxpose.xlu0.b32.cont [14/16] 0.0, 128
    %551 = vxpose.xlu0.b32.cont [15/16] 0.0, 128
    %552 = vxpose.xlu0.b32.end [16/16] 0.0, 128
    %v553 = vpop.trf.xlu0
    %v554 = vpop.trf.xlu0
    %v555 = vpop.trf.xlu0
    %v556 = vpop.trf.xlu0
    %v557 = vpop.trf.xlu0
    %v558 = vpop.trf.xlu0
    %v559 = vpop.trf.xlu0
    %v560 = vpop.trf.xlu0
    %v561 = vpop.trf.xlu0
    %v562 = vpop.trf.xlu0
    %v563 = vpop.trf.xlu0
    %v564 = vpop.trf.xlu0
    %v565 = vpop.trf.xlu0
    %v566 = vpop.trf.xlu0
    %v567 = vpop.trf.xlu0
    %v568 = vpop.trf.xlu0
    %569 = vxpose.xlu0.b32.start [1/16] %v96, 128
    %570 = vxpose.xlu0.b32.cont [2/16] 0.0, 128
    %571 = vxpose.xlu0.b32.cont [3/16] 0.0, 128
    %572 = vxpose.xlu0.b32.cont [4/16] 0.0, 128
    %573 = vxpose.xlu0.b32.cont [5/16] 0.0, 128
    %574 = vxpose.xlu0.b32.cont [6/16] 0.0, 128
    %575 = vxpose.xlu0.b32.cont [7/16] 0.0, 128
    %576 = vxpose.xlu0.b32.cont [8/16] 0.0, 128
    %577 = vxpose.xlu0.b32.cont [9/16] 0.0, 128
    %578 = vxpose.xlu0.b32.cont [10/16] 0.0, 128
    %579 = vxpose.xlu0.b32.cont [11/16] 0.0, 128
    %580 = vxpose.xlu0.b32.cont [12/16] 0.0, 128
    %581 = vxpose.xlu0.b32.cont [13/16] 0.0, 128
    %582 = vxpose.xlu0.b32.cont [14/16] 0.0, 128
    %583 = vxpose.xlu0.b32.cont [15/16] 0.0, 128
    %584 = vxpose.xlu0.b32.end [16/16] 0.0, 128
    %v585 = vpop.trf.xlu0
    %v586 = vpop.trf.xlu0
    %v587 = vpop.trf.xlu0
    %v588 = vpop.trf.xlu0
    %v589 = vpop.trf.xlu0
    %v590 = vpop.trf.xlu0
    %v591 = vpop.trf.xlu0
    %v592 = vpop.trf.xlu0
    %v593 = vpop.trf.xlu0
    %v594 = vpop.trf.xlu0
    %v595 = vpop.trf.xlu0
    %v596 = vpop.trf.xlu0
    %v597 = vpop.trf.xlu0
    %v598 = vpop.trf.xlu0
    %v599 = vpop.trf.xlu0
    %v600 = vpop.trf.xlu0
    %601 = vxpose.xlu0.b32.start [1/16] %v112, 128
    %602 = vxpose.xlu0.b32.cont [2/16] 0.0, 128
    %603 = vxpose.xlu0.b32.cont [3/16] 0.0, 128
    %604 = vxpose.xlu0.b32.cont [4/16] 0.0, 128
    %605 = vxpose.xlu0.b32.cont [5/16] 0.0, 128
    %606 = vxpose.xlu0.b32.cont [6/16] 0.0, 128
    %607 = vxpose.xlu0.b32.cont [7/16] 0.0, 128
    %608 = vxpose.xlu0.b32.cont [8/16] 0.0, 128
    %609 = vxpose.xlu0.b32.cont [9/16] 0.0, 128
    %610 = vxpose.xlu0.b32.cont [10/16] 0.0, 128
    %611 = vxpose.xlu0.b32.cont [11/16] 0.0, 128
    %612 = vxpose.xlu0.b32.cont [12/16] 0.0, 128
    %613 = vxpose.xlu0.b32.cont [13/16] 0.0, 128
    %614 = vxpose.xlu0.b32.cont [14/16] 0.0, 128
    %615 = vxpose.xlu0.b32.cont [15/16] 0.0, 128
    %616 = vxpose.xlu0.b32.end [16/16] 0.0, 128
    %v617 = vpop.trf.xlu0
    %v618 = vpop.trf.xlu0
    %v619 = vpop.trf.xlu0
    %v620 = vpop.trf.xlu0
    %v621 = vpop.trf.xlu0
    %v622 = vpop.trf.xlu0
    %v623 = vpop.trf.xlu0
    %v624 = vpop.trf.xlu0
    %v625 = vpop.trf.xlu0
    %v626 = vpop.trf.xlu0
    %v627 = vpop.trf.xlu0
    %v628 = vpop.trf.xlu0
    %v629 = vpop.trf.xlu0
    %v630 = vpop.trf.xlu0
    %v631 = vpop.trf.xlu0
    %v632 = vpop.trf.xlu0
    %v633 = vpack.c.bf16 %v138, %v137
    %v634 = vpack.c.bf16 %v140, %v139
    %v635 = vpack.c.bf16 %v142, %v141
    %v636 = vpack.c.bf16 %v144, %v143
    %v637 = vpack.c.bf16 %v146, %v145
    %v638 = vpack.c.bf16 %v148, %v147
    %v639 = vpack.c.bf16 %v150, %v149
    %v640 = vpack.c.bf16 %v152, %v151
    %v641 = vpack.c.bf16 %v170, %v169
    %v642 = vpack.c.bf16 %v172, %v171
    %v643 = vpack.c.bf16 %v174, %v173
    %v644 = vpack.c.bf16 %v176, %v175
    %v645 = vpack.c.bf16 %v178, %v177
    %v646 = vpack.c.bf16 %v180, %v179
    %v647 = vpack.c.bf16 %v182, %v181
    %v648 = vpack.c.bf16 %v184, %v183
    %v649 = vpack.c.bf16 %v202, %v201
    %v650 = vpack.c.bf16 %v204, %v203
    %v651 = vpack.c.bf16 %v206, %v205
    %v652 = vpack.c.bf16 %v208, %v207
    %v653 = vpack.c.bf16 %v210, %v209
    %v654 = vpack.c.bf16 %v212, %v211
    %v655 = vpack.c.bf16 %v214, %v213
    %v656 = vpack.c.bf16 %v216, %v215
    %v657 = vpack.c.bf16 %v234, %v233
    %v658 = vpack.c.bf16 %v236, %v235
    %v659 = vpack.c.bf16 %v238, %v237
    %v660 = vpack.c.bf16 %v240, %v239
    %v661 = vpack.c.bf16 %v242, %v241
    %v662 = vpack.c.bf16 %v244, %v243
    %v663 = vpack.c.bf16 %v246, %v245
    %v664 = vpack.c.bf16 %v248, %v247
    %v665 = vpack.c.bf16 %v266, %v265
    %v666 = vpack.c.bf16 %v268, %v267
    %v667 = vpack.c.bf16 %v270, %v269
    %v668 = vpack.c.bf16 %v272, %v271
    %v669 = vpack.c.bf16 %v274, %v273
    %v670 = vpack.c.bf16 %v276, %v275
    %v671 = vpack.c.bf16 %v278, %v277
    %v672 = vpack.c.bf16 %v280, %v279
    %v673 = vpack.c.bf16 %v298, %v297
    %v674 = vpack.c.bf16 %v300, %v299
    %v675 = vpack.c.bf16 %v302, %v301
    %v676 = vpack.c.bf16 %v304, %v303
    %v677 = vpack.c.bf16 %v306, %v305
    %v678 = vpack.c.bf16 %v308, %v307
    %v679 = vpack.c.bf16 %v310, %v309
    %v680 = vpack.c.bf16 %v312, %v311
    %v681 = vpack.c.bf16 %v330, %v329
    %v682 = vpack.c.bf16 %v332, %v331
    %v683 = vpack.c.bf16 %v334, %v333
    %v684 = vpack.c.bf16 %v336, %v335
    %v685 = vpack.c.bf16 %v338, %v337
    %v686 = vpack.c.bf16 %v340, %v339
    %v687 = vpack.c.bf16 %v342, %v341
    %v688 = vpack.c.bf16 %v344, %v343
    %v689 = vpack.c.bf16 %v362, %v361
    %v690 = vpack.c.bf16 %v364, %v363
    %v691 = vpack.c.bf16 %v366, %v365
    %v692 = vpack.c.bf16 %v368, %v367
    %v693 = vpack.c.bf16 %v370, %v369
    %v694 = vpack.c.bf16 %v372, %v371
    %v695 = vpack.c.bf16 %v374, %v373
    %v696 = vpack.c.bf16 %v376, %v375
    %v697 = vpack.c.bf16 %v394, %v393
    %v698 = vpack.c.bf16 %v396, %v395
    %v699 = vpack.c.bf16 %v398, %v397
    %v700 = vpack.c.bf16 %v400, %v399
    %v701 = vpack.c.bf16 %v402, %v401
    %v702 = vpack.c.bf16 %v404, %v403
    %v703 = vpack.c.bf16 %v406, %v405
    %v704 = vpack.c.bf16 %v408, %v407
    %v705 = vpack.c.bf16 %v426, %v425
    %v706 = vpack.c.bf16 %v428, %v427
    %v707 = vpack.c.bf16 %v430, %v429
    %v708 = vpack.c.bf16 %v432, %v431
    %v709 = vpack.c.bf16 %v434, %v433
    %v710 = vpack.c.bf16 %v436, %v435
    %v711 = vpack.c.bf16 %v438, %v437
    %v712 = vpack.c.bf16 %v440, %v439
    %v713 = vpack.c.bf16 %v458, %v457
    %v714 = vpack.c.bf16 %v460, %v459
    %v715 = vpack.c.bf16 %v462, %v461
    %v716 = vpack.c.bf16 %v464, %v463
    %v717 = vpack.c.bf16 %v466, %v465
    %v718 = vpack.c.bf16 %v468, %v467
    %v719 = vpack.c.bf16 %v470, %v469
    %v720 = vpack.c.bf16 %v472, %v471
    %v721 = vpack.c.bf16 %v490, %v489
    %v722 = vpack.c.bf16 %v492, %v491
    %v723 = vpack.c.bf16 %v494, %v493
    %v724 = vpack.c.bf16 %v496, %v495
    %v725 = vpack.c.bf16 %v498, %v497
    %v726 = vpack.c.bf16 %v500, %v499
    %v727 = vpack.c.bf16 %v502, %v501
    %v728 = vpack.c.bf16 %v504, %v503
    %v729 = vpack.c.bf16 %v522, %v521
    %v730 = vpack.c.bf16 %v524, %v523
    %v731 = vpack.c.bf16 %v526, %v525
    %v732 = vpack.c.bf16 %v528, %v527
    %v733 = vpack.c.bf16 %v530, %v529
    %v734 = vpack.c.bf16 %v532, %v531
    %v735 = vpack.c.bf16 %v534, %v533
    %v736 = vpack.c.bf16 %v536, %v535
    %v737 = vpack.c.bf16 %v554, %v553
    %v738 = vpack.c.bf16 %v556, %v555
    %v739 = vpack.c.bf16 %v558, %v557
    %v740 = vpack.c.bf16 %v560, %v559
    %v741 = vpack.c.bf16 %v562, %v561
    %v742 = vpack.c.bf16 %v564, %v563
    %v743 = vpack.c.bf16 %v566, %v565
    %v744 = vpack.c.bf16 %v568, %v567
    %v745 = vpack.c.bf16 %v586, %v585
    %v746 = vpack.c.bf16 %v588, %v587
    %v747 = vpack.c.bf16 %v590, %v589
    %v748 = vpack.c.bf16 %v592, %v591
    %v749 = vpack.c.bf16 %v594, %v593
    %v750 = vpack.c.bf16 %v596, %v595
    %v751 = vpack.c.bf16 %v598, %v597
    %v752 = vpack.c.bf16 %v600, %v599
    %v753 = vpack.c.bf16 %v618, %v617
    %v754 = vpack.c.bf16 %v620, %v619
    %v755 = vpack.c.bf16 %v622, %v621
    %v756 = vpack.c.bf16 %v624, %v623
    %v757 = vpack.c.bf16 %v626, %v625
    %v758 = vpack.c.bf16 %v628, %v627
    %v759 = vpack.c.bf16 %v630, %v629
    %v760 = vpack.c.bf16 %v632, %v631
    %v761 = vld [vmem:[#allocation6] sm:$0x3]
    %v762 = vld [vmem:[#allocation8] sm:$0x1]
    %v764 = vlaneseq
    %v765 = vshrl.u32 %v764, 7
    %v766 = vsub.s32 0, %v765
    %v767 = vrot.slane %v762, %v766
    %vm769 = vcmask 31744
    %v771 = vsel %vm769, %v633, 0
    %v774 = vsel %vm769, %v634, 0
    %v777 = vsel %vm769, %v635, 0
    %v780 = vsel %vm769, %v636, 0
    %v783 = vsel %vm769, %v637, 0
    %v786 = vsel %vm769, %v638, 0
    %v789 = vsel %vm769, %v639, 0
    %v792 = vsel %vm769, %v640, 0
    %v795 = vsel %vm769, %v641, 0
    %v798 = vsel %vm769, %v642, 0
    %v801 = vsel %vm769, %v643, 0
    %v804 = vsel %vm769, %v644, 0
    %v807 = vsel %vm769, %v645, 0
    %v810 = vsel %vm769, %v646, 0
    %v813 = vsel %vm769, %v647, 0
    %v816 = vsel %vm769, %v648, 0
    %v819 = vsel %vm769, %v649, 0
    %v822 = vsel %vm769, %v650, 0
    %v825 = vsel %vm769, %v651, 0
    %v828 = vsel %vm769, %v652, 0
    %v831 = vsel %vm769, %v653, 0
    %v834 = vsel %vm769, %v654, 0
    %v837 = vsel %vm769, %v655, 0
    %v840 = vsel %vm769, %v656, 0
    %v843 = vsel %vm769, %v657, 0
    %v846 = vsel %vm769, %v658, 0
    %v849 = vsel %vm769, %v659, 0
    %v852 = vsel %vm769, %v660, 0
    %v855 = vsel %vm769, %v661, 0
    %v858 = vsel %vm769, %v662, 0
    %v861 = vsel %vm769, %v663, 0
    %v864 = vsel %vm769, %v664, 0
    %v867 = vsel %vm769, %v665, 0
    %v870 = vsel %vm769, %v666, 0
    %v873 = vsel %vm769, %v667, 0
    %v876 = vsel %vm769, %v668, 0
    %v879 = vsel %vm769, %v669, 0
    %v882 = vsel %vm769, %v670, 0
    %v885 = vsel %vm769, %v671, 0
    %v888 = vsel %vm769, %v672, 0
    %v891 = vsel %vm769, %v673, 0
    %v894 = vsel %vm769, %v674, 0
    %v897 = vsel %vm769, %v675, 0
    %v900 = vsel %vm769, %v676, 0
    %v903 = vsel %vm769, %v677, 0
    %v906 = vsel %vm769, %v678, 0
    %v909 = vsel %vm769, %v679, 0
    %v912 = vsel %vm769, %v680, 0
    %v915 = vsel %vm769, %v681, 0
    %v918 = vsel %vm769, %v682, 0
    %v921 = vsel %vm769, %v683, 0
    %v924 = vsel %vm769, %v684, 0
    %v927 = vsel %vm769, %v685, 0
    %v930 = vsel %vm769, %v686, 0
    %v933 = vsel %vm769, %v687, 0
    %v936 = vsel %vm769, %v688, 0
    %v939 = vsel %vm769, %v689, 0
    %v942 = vsel %vm769, %v690, 0
    %v945 = vsel %vm769, %v691, 0
    %v948 = vsel %vm769, %v692, 0
    %v951 = vsel %vm769, %v693, 0
    %v954 = vsel %vm769, %v694, 0
    %v957 = vsel %vm769, %v695, 0
    %v960 = vsel %vm769, %v696, 0
    %v963 = vsel %vm769, %v697, 0
    %v966 = vsel %vm769, %v698, 0
    %v969 = vsel %vm769, %v699, 0
    %v972 = vsel %vm769, %v700, 0
    %v975 = vsel %vm769, %v701, 0
    %v978 = vsel %vm769, %v702, 0
    %v981 = vsel %vm769, %v703, 0
    %v984 = vsel %vm769, %v704, 0
    %v987 = vsel %vm769, %v705, 0
    %v990 = vsel %vm769, %v706, 0
    %v993 = vsel %vm769, %v707, 0
    %v996 = vsel %vm769, %v708, 0
    %v999 = vsel %vm769, %v709, 0
    %v1002 = vsel %vm769, %v710, 0
    %v1005 = vsel %vm769, %v711, 0
    %v1008 = vsel %vm769, %v712, 0
    %v1011 = vsel %vm769, %v713, 0
    %v1014 = vsel %vm769, %v714, 0
    %v1017 = vsel %vm769, %v715, 0
    %v1020 = vsel %vm769, %v716, 0
    %v1023 = vsel %vm769, %v717, 0
    %v1026 = vsel %vm769, %v718, 0
    %v1029 = vsel %vm769, %v719, 0
    %v1032 = vsel %vm769, %v720, 0
    %v1035 = vsel %vm769, %v721, 0
    %v1038 = vsel %vm769, %v722, 0
    %v1041 = vsel %vm769, %v723, 0
    %v1044 = vsel %vm769, %v724, 0
    %v1047 = vsel %vm769, %v725, 0
    %v1050 = vsel %vm769, %v726, 0
    %v1053 = vsel %vm769, %v727, 0
    %v1056 = vsel %vm769, %v728, 0
    %v1059 = vsel %vm769, %v729, 0
    %v1062 = vsel %vm769, %v730, 0
    %v1065 = vsel %vm769, %v731, 0
    %v1068 = vsel %vm769, %v732, 0
    %v1071 = vsel %vm769, %v733, 0
    %v1074 = vsel %vm769, %v734, 0
    %v1077 = vsel %vm769, %v735, 0
    %v1080 = vsel %vm769, %v736, 0
    %v1083 = vsel %vm769, %v737, 0
    %v1086 = vsel %vm769, %v738, 0
    %v1089 = vsel %vm769, %v739, 0
    %v1092 = vsel %vm769, %v740, 0
    %v1095 = vsel %vm769, %v741, 0
    %v1098 = vsel %vm769, %v742, 0
    %v1101 = vsel %vm769, %v743, 0
    %v1104 = vsel %vm769, %v744, 0
    %v1107 = vsel %vm769, %v745, 0
    %v1110 = vsel %vm769, %v746, 0
    %v1113 = vsel %vm769, %v747, 0
    %v1116 = vsel %vm769, %v748, 0
    %v1119 = vsel %vm769, %v749, 0
    %v1122 = vsel %vm769, %v750, 0
    %v1125 = vsel %vm769, %v751, 0
    %v1128 = vsel %vm769, %v752, 0
    %v1131 = vsel %vm769, %v753, 0
    %v1134 = vsel %vm769, %v754, 0
    %v1137 = vsel %vm769, %v755, 0
    %v1140 = vsel %vm769, %v756, 0
    %v1143 = vsel %vm769, %v757, 0
    %v1146 = vsel %vm769, %v758, 0
    %v1149 = vsel %vm769, %v759, 0
    %v1152 = vsel %vm769, %v760, 0
    %vm1154 = vcmask 1041408
    %v1156 = vsel %vm1154, %v761, 0
    %1158 = vmatprep.subr.bf16.mxu0 0
    %1159 = vmatpush1.bf16.msra.mxu0 %v1156
    %1160 = vmatprep.subr.bf16.mxu0 0
    %1161 = vmatpush1.bf16.msra.mxu0 0
    %1162 = vmatprep.subr.bf16.mxu0 0
    %1163 = vmatpush1.bf16.msra.mxu0 0
    %1164 = vmatprep.subr.bf16.mxu0 0
    %1165 = vmatpush1.bf16.msra.mxu0 0
    %1166 = vmatprep.subr.bf16.mxu0 0
    %1167 = vmatpush1.bf16.msra.mxu0 0
    %1168 = vmatprep.subr.bf16.mxu0 0
    %1169 = vmatpush1.bf16.msra.mxu0 0
    %1170 = vmatprep.subr.bf16.mxu0 0
    %1171 = vmatpush1.bf16.msra.mxu0 0
    %1172 = vmatprep.subr.bf16.mxu0 0
    %1173 = vmatpush1.bf16.msra.mxu0 0
    %1174 = vmatprep.subr.bf16.mxu0 0
    %1175 = vmatpush1.bf16.msra.mxu0 0
    %1176 = vmatprep.subr.bf16.mxu0 0
    %1177 = vmatpush1.bf16.msra.mxu0 0
    %1178 = vmatprep.subr.bf16.mxu0 0
    %1179 = vmatpush1.bf16.msra.mxu0 0
    %1180 = vmatprep.subr.bf16.mxu0 0
    %1181 = vmatpush1.bf16.msra.mxu0 0
    %1182 = vmatprep.subr.bf16.mxu0 0
    %1183 = vmatpush1.bf16.msra.mxu0 0
    %1184 = vmatprep.subr.bf16.mxu0 0
    %1185 = vmatpush1.bf16.msra.mxu0 0
    %1186 = vmatprep.subr.bf16.mxu0 0
    %1187 = vmatpush1.bf16.msra.mxu0 0
    %1188 = vmatprep.subr.bf16.mxu0 0
    %1189 = vmatpush1.bf16.msra.mxu0 0
    %1190 = vmatprep.mubr.bf16.mxu0 0
    %1191 = vmatmul.mubr.bf16.gmra.mrb[0].mxu0 %v771
    %v1192 = vpop.f32.mrb[0].mxu0
    %v1193 = vadd.f32 %v767, %v1192
    %v1194 = vpop.f32.mrb[0].mxu0
    %v1195 = vpop.f32.mrb[0].mxu0
    %v1196 = vadd.f32 %v767, %v1195
    %v1197 = vpop.f32.mrb[0].mxu0
    %1198 = vmatprep.mubr.bf16.mxu0 0
    %1199 = vmatmul.mubr.bf16.gmra.mrb[0].mxu0 %v774
    %v1200 = vpop.f32.mrb[0].mxu0
    %v1201 = vadd.f32 %v767, %v1200
    %v1202 = vpop.f32.mrb[0].mxu0
    %v1203 = vpop.f32.mrb[0].mxu0
    %v1204 = vadd.f32 %v767, %v1203
    %v1205 = vpop.f32.mrb[0].mxu0
    %1206 = vmatprep.mubr.bf16.mxu0 0
    %1207 = vmatmul.mubr.bf16.gmra.mrb[0].mxu0 %v777
    %v1208 = vpop.f32.mrb[0].mxu0
    %v1209 = vadd.f32 %v767, %v1208
    %v1210 = vpop.f32.mrb[0].mxu0
    %v1211 = vpop.f32.mrb[0].mxu0
    %v1212 = vadd.f32 %v767, %v1211
    %v1213 = vpop.f32.mrb[0].mxu0
    %1214 = vmatprep.mubr.bf16.mxu0 0
    %1215 = vmatmul.mubr.bf16.gmra.mrb[0].mxu0 %v780
    %v1216 = vpop.f32.mrb[0].mxu0
    %v1217 = vadd.f32 %v767, %v1216
    %v1218 = vpop.f32.mrb[0].mxu0
    %v1219 = vpop.f32.mrb[0].mxu0
    %v1220 = vadd.f32 %v767, %v1219
    %v1221 = vpop.f32.mrb[0].mxu0
    %1222 = vmatprep.mubr.bf16.mxu0 0
    %1223 = vmatmul.mubr.bf16.gmra.mrb[0].mxu0 %v783
    %v1224 = vpop.f32.mrb[0].mxu0
    %v1225 = vadd.f32 %v767, %v1224
    %v1226 = vpop.f32.mrb[0].mxu0
    %v1227 = vpop.f32.mrb[0].mxu0
    %v1228 = vadd.f32 %v767, %v1227
    %v1229 = vpop.f32.mrb[0].mxu0
    %1230 = vmatprep.mubr.bf16.mxu0 0
    %1231 = vmatmul.mubr.bf16.gmra.mrb[0].mxu0 %v786
    %v1232 = vpop.f32.mrb[0].mxu0
    %v1233 = vadd.f32 %v767, %v1232
    %v1234 = vpop.f32.mrb[0].mxu0
    %v1235 = vpop.f32.mrb[0].mxu0
    %v1236 = vadd.f32 %v767, %v1235
    %v1237 = vpop.f32.mrb[0].mxu0
    %1238 = vmatprep.mubr.bf16.mxu0 0
    %1239 = vmatmul.mubr.bf16.gmra.mrb[0].mxu0 %v789
    %v1240 = vpop.f32.mrb[0].mxu0
    %v1241 = vadd.f32 %v767, %v1240
    %v1242 = vpop.f32.mrb[0].mxu0
    %v1243 = vpop.f32.mrb[0].mxu0
    %v1244 = vadd.f32 %v767, %v1243
    %v1245 = vpop.f32.mrb[0].mxu0
    %1246 = vmatprep.mubr.bf16.mxu0 0
    %1247 = vmatmul.mubr.bf16.gmra.mrb[0].mxu0 %v792
    %v1248 = vpop.f32.mrb[0].mxu0
    %v1249 = vadd.f32 %v767, %v1248
    %v1250 = vpop.f32.mrb[0].mxu0
    %v1251 = vpop.f32.mrb[0].mxu0
    %v1252 = vadd.f32 %v767, %v1251
    %v1253 = vpop.f32.mrb[0].mxu0
    %1254 = vmatprep.mubr.bf16.mxu0 0
    %1255 = vmatmul.mubr.bf16.gmra.mrb[0].mxu0 %v795
    %v1256 = vpop.f32.mrb[0].mxu0
    %v1257 = vadd.f32 %v767, %v1256
    %v1258 = vpop.f32.mrb[0].mxu0
    %v1259 = vpop.f32.mrb[0].mxu0
    %v1260 = vadd.f32 %v767, %v1259
    %v1261 = vpop.f32.mrb[0].mxu0
    %1262 = vmatprep.mubr.bf16.mxu0 0
    %1263 = vmatmul.mubr.bf16.gmra.mrb[0].mxu0 %v798
    %v1264 = vpop.f32.mrb[0].mxu0
    %v1265 = vadd.f32 %v767, %v1264
    %v1266 = vpop.f32.mrb[0].mxu0
    %v1267 = vpop.f32.mrb[0].mxu0
    %v1268 = vadd.f32 %v767, %v1267
    %v1269 = vpop.f32.mrb[0].mxu0
    %1270 = vmatprep.mubr.bf16.mxu0 0
    %1271 = vmatmul.mubr.bf16.gmra.mrb[0].mxu0 %v801
    %v1272 = vpop.f32.mrb[0].mxu0
    %v1273 = vadd.f32 %v767, %v1272
    %v1274 = vpop.f32.mrb[0].mxu0
    %v1275 = vpop.f32.mrb[0].mxu0
    %v1276 = vadd.f32 %v767, %v1275
    %v1277 = vpop.f32.mrb[0].mxu0
    %1278 = vmatprep.mubr.bf16.mxu0 0
    %1279 = vmatmul.mubr.bf16.gmra.mrb[0].mxu0 %v804
    %v1280 = vpop.f32.mrb[0].mxu0
    %v1281 = vadd.f32 %v767, %v1280
    %v1282 = vpop.f32.mrb[0].mxu0
    %v1283 = vpop.f32.mrb[0].mxu0
    %v1284 = vadd.f32 %v767, %v1283
    %v1285 = vpop.f32.mrb[0].mxu0
    %1286 = vmatprep.mubr.bf16.mxu0 0
    %1287 = vmatmul.mubr.bf16.gmra.mrb[0].mxu0 %v807
    %v1288 = vpop.f32.mrb[0].mxu0
    %v1289 = vadd.f32 %v767, %v1288
    %v1290 = vpop.f32.mrb[0].mxu0
    %v1291 = vpop.f32.mrb[0].mxu0
    %v1292 = vadd.f32 %v767, %v1291
    %v1293 = vpop.f32.mrb[0].mxu0
    %1294 = vmatprep.mubr.bf16.mxu0 0
    %1295 = vmatmul.mubr.bf16.gmra.mrb[0].mxu0 %v810
    %v1296 = vpop.f32.mrb[0].mxu0
    %v1297 = vadd.f32 %v767, %v1296
    %v1298 = vpop.f32.mrb[0].mxu0
    %v1299 = vpop.f32.mrb[0].mxu0
    %v1300 = vadd.f32 %v767, %v1299
    %v1301 = vpop.f32.mrb[0].mxu0
    %1302 = vmatprep.mubr.bf16.mxu0 0
    %1303 = vmatmul.mubr.bf16.gmra.mrb[0].mxu0 %v813
    %v1304 = vpop.f32.mrb[0].mxu0
    %v1305 = vadd.f32 %v767, %v1304
    %v1306 = vpop.f32.mrb[0].mxu0
    %v1307 = vpop.f32.mrb[0].mxu0
    %v1308 = vadd.f32 %v767, %v1307
    %v1309 = vpop.f32.mrb[0].mxu0
    %1310 = vmatprep.mubr.bf16.mxu0 0
    %1311 = vmatmul.mubr.bf16.gmra.mrb[0].mxu0 %v816
    %v1312 = vpop.f32.mrb[0].mxu0
    %v1313 = vadd.f32 %v767, %v1312
    %v1314 = vpop.f32.mrb[0].mxu0
    %v1315 = vpop.f32.mrb[0].mxu0
    %v1316 = vadd.f32 %v767, %v1315
    %v1317 = vpop.f32.mrb[0].mxu0
    %1318 = vmatprep.mubr.bf16.mxu0 0
    %1319 = vmatmul.mubr.bf16.gmra.mrb[0].mxu0 %v819
    %v1320 = vpop.f32.mrb[0].mxu0
    %v1321 = vadd.f32 %v767, %v1320
    %v1322 = vpop.f32.mrb[0].mxu0
    %v1323 = vpop.f32.mrb[0].mxu0
    %v1324 = vadd.f32 %v767, %v1323
    %v1325 = vpop.f32.mrb[0].mxu0
    %1326 = vmatprep.mubr.bf16.mxu0 0
    %1327 = vmatmul.mubr.bf16.gmra.mrb[0].mxu0 %v822
    %v1328 = vpop.f32.mrb[0].mxu0
    %v1329 = vadd.f32 %v767, %v1328
    %v1330 = vpop.f32.mrb[0].mxu0
    %v1331 = vpop.f32.mrb[0].mxu0
    %v1332 = vadd.f32 %v767, %v1331
    %v1333 = vpop.f32.mrb[0].mxu0
    %1334 = vmatprep.mubr.bf16.mxu0 0
    %1335 = vmatmul.mubr.bf16.gmra.mrb[0].mxu0 %v825
    %v1336 = vpop.f32.mrb[0].mxu0
    %v1337 = vadd.f32 %v767, %v1336
    %v1338 = vpop.f32.mrb[0].mxu0
    %v1339 = vpop.f32.mrb[0].mxu0
    %v1340 = vadd.f32 %v767, %v1339
    %v1341 = vpop.f32.mrb[0].mxu0
    %1342 = vmatprep.mubr.bf16.mxu0 0
    %1343 = vmatmul.mubr.bf16.gmra.mrb[0].mxu0 %v828
    %v1344 = vpop.f32.mrb[0].mxu0
    %v1345 = vadd.f32 %v767, %v1344
    %v1346 = vpop.f32.mrb[0].mxu0
    %v1347 = vpop.f32.mrb[0].mxu0
    %v1348 = vadd.f32 %v767, %v1347
    %v1349 = vpop.f32.mrb[0].mxu0
    %1350 = vmatprep.mubr.bf16.mxu0 0
    %1351 = vmatmul.mubr.bf16.gmra.mrb[0].mxu0 %v831
    %v1352 = vpop.f32.mrb[0].mxu0
    %v1353 = vadd.f32 %v767, %v1352
    %v1354 = vpop.f32.mrb[0].mxu0
    %v1355 = vpop.f32.mrb[0].mxu0
    %v1356 = vadd.f32 %v767, %v1355
    %v1357 = vpop.f32.mrb[0].mxu0
    %1358 = vmatprep.mubr.bf16.mxu0 0
    %1359 = vmatmul.mubr.bf16.gmra.mrb[0].mxu0 %v834
    %v1360 = vpop.f32.mrb[0].mxu0
    %v1361 = vadd.f32 %v767, %v1360
    %v1362 = vpop.f32.mrb[0].mxu0
    %v1363 = vpop.f32.mrb[0].mxu0
    %v1364 = vadd.f32 %v767, %v1363
    %v1365 = vpop.f32.mrb[0].mxu0
    %1366 = vmatprep.mubr.bf16.mxu0 0
    %1367 = vmatmul.mubr.bf16.gmra.mrb[0].mxu0 %v837
    %v1368 = vpop.f32.mrb[0].mxu0
    %v1369 = vadd.f32 %v767, %v1368
    %v1370 = vpop.f32.mrb[0].mxu0
    %v1371 = vpop.f32.mrb[0].mxu0
    %v1372 = vadd.f32 %v767, %v1371
    %v1373 = vpop.f32.mrb[0].mxu0
    %1374 = vmatprep.mubr.bf16.mxu0 0
    %1375 = vmatmul.mubr.bf16.gmra.mrb[0].mxu0 %v840
    %v1376 = vpop.f32.mrb[0].mxu0
    %v1377 = vadd.f32 %v767, %v1376
    %v1378 = vpop.f32.mrb[0].mxu0
    %v1379 = vpop.f32.mrb[0].mxu0
    %v1380 = vadd.f32 %v767, %v1379
    %v1381 = vpop.f32.mrb[0].mxu0
    %1382 = vmatprep.mubr.bf16.mxu0 0
    %1383 = vmatmul.mubr.bf16.gmra.mrb[0].mxu0 %v843
    %v1384 = vpop.f32.mrb[0].mxu0
    %v1385 = vadd.f32 %v767, %v1384
    %v1386 = vpop.f32.mrb[0].mxu0
    %v1387 = vpop.f32.mrb[0].mxu0
    %v1388 = vadd.f32 %v767, %v1387
    %v1389 = vpop.f32.mrb[0].mxu0
    %1390 = vmatprep.mubr.bf16.mxu0 0
    %1391 = vmatmul.mubr.bf16.gmra.mrb[0].mxu0 %v846
    %v1392 = vpop.f32.mrb[0].mxu0
    %v1393 = vadd.f32 %v767, %v1392
    %v1394 = vpop.f32.mrb[0].mxu0
    %v1395 = vpop.f32.mrb[0].mxu0
    %v1396 = vadd.f32 %v767, %v1395
    %v1397 = vpop.f32.mrb[0].mxu0
    %1398 = vmatprep.mubr.bf16.mxu0 0
    %1399 = vmatmul.mubr.bf16.gmra.mrb[0].mxu0 %v849
    %v1400 = vpop.f32.mrb[0].mxu0
    %v1401 = vadd.f32 %v767, %v1400
    %v1402 = vpop.f32.mrb[0].mxu0
    %v1403 = vpop.f32.mrb[0].mxu0
    %v1404 = vadd.f32 %v767, %v1403
    %v1405 = vpop.f32.mrb[0].mxu0
    %1406 = vmatprep.mubr.bf16.mxu0 0
    %1407 = vmatmul.mubr.bf16.gmra.mrb[0].mxu0 %v852
    %v1408 = vpop.f32.mrb[0].mxu0
    %v1409 = vadd.f32 %v767, %v1408
    %v1410 = vpop.f32.mrb[0].mxu0
    %v1411 = vpop.f32.mrb[0].mxu0
    %v1412 = vadd.f32 %v767, %v1411
    %v1413 = vpop.f32.mrb[0].mxu0
    %1414 = vmatprep.mubr.bf16.mxu0 0
    %1415 = vmatmul.mubr.bf16.gmra.mrb[0].mxu0 %v855
    %v1416 = vpop.f32.mrb[0].mxu0
    %v1417 = vadd.f32 %v767, %v1416
    %v1418 = vpop.f32.mrb[0].mxu0
    %v1419 = vpop.f32.mrb[0].mxu0
    %v1420 = vadd.f32 %v767, %v1419
    %v1421 = vpop.f32.mrb[0].mxu0
    %1422 = vmatprep.mubr.bf16.mxu0 0
    %1423 = vmatmul.mubr.bf16.gmra.mrb[0].mxu0 %v858
    %v1424 = vpop.f32.mrb[0].mxu0
    %v1425 = vadd.f32 %v767, %v1424
    %v1426 = vpop.f32.mrb[0].mxu0
    %v1427 = vpop.f32.mrb[0].mxu0
    %v1428 = vadd.f32 %v767, %v1427
    %v1429 = vpop.f32.mrb[0].mxu0
    %1430 = vmatprep.mubr.bf16.mxu0 0
    %1431 = vmatmul.mubr.bf16.gmra.mrb[0].mxu0 %v861
    %v1432 = vpop.f32.mrb[0].mxu0
    %v1433 = vadd.f32 %v767, %v1432
    %v1434 = vpop.f32.mrb[0].mxu0
    %v1435 = vpop.f32.mrb[0].mxu0
    %v1436 = vadd.f32 %v767, %v1435
    %v1437 = vpop.f32.mrb[0].mxu0
    %1438 = vmatprep.mubr.bf16.mxu0 0
    %1439 = vmatmul.mubr.bf16.gmra.mrb[0].mxu0 %v864
    %v1440 = vpop.f32.mrb[0].mxu0
    %v1441 = vadd.f32 %v767, %v1440
    %v1442 = vpop.f32.mrb[0].mxu0
    %v1443 = vpop.f32.mrb[0].mxu0
    %v1444 = vadd.f32 %v767, %v1443
    %v1445 = vpop.f32.mrb[0].mxu0
    %1446 = vmatprep.mubr.bf16.mxu0 0
    %1447 = vmatmul.mubr.bf16.gmra.mrb[0].mxu0 %v867
    %v1448 = vpop.f32.mrb[0].mxu0
    %v1449 = vadd.f32 %v767, %v1448
    %v1450 = vpop.f32.mrb[0].mxu0
    %v1451 = vpop.f32.mrb[0].mxu0
    %v1452 = vadd.f32 %v767, %v1451
    %v1453 = vpop.f32.mrb[0].mxu0
    %1454 = vmatprep.mubr.bf16.mxu0 0
    %1455 = vmatmul.mubr.bf16.gmra.mrb[0].mxu0 %v870
    %v1456 = vpop.f32.mrb[0].mxu0
    %v1457 = vadd.f32 %v767, %v1456
    %v1458 = vpop.f32.mrb[0].mxu0
    %v1459 = vpop.f32.mrb[0].mxu0
    %v1460 = vadd.f32 %v767, %v1459
    %v1461 = vpop.f32.mrb[0].mxu0
    %1462 = vmatprep.mubr.bf16.mxu0 0
    %1463 = vmatmul.mubr.bf16.gmra.mrb[0].mxu0 %v873
    %v1464 = vpop.f32.mrb[0].mxu0
    %v1465 = vadd.f32 %v767, %v1464
    %v1466 = vpop.f32.mrb[0].mxu0
    %v1467 = vpop.f32.mrb[0].mxu0
    %v1468 = vadd.f32 %v767, %v1467
    %v1469 = vpop.f32.mrb[0].mxu0
    %1470 = vmatprep.mubr.bf16.mxu0 0
    %1471 = vmatmul.mubr.bf16.gmra.mrb[0].mxu0 %v876
    %v1472 = vpop.f32.mrb[0].mxu0
    %v1473 = vadd.f32 %v767, %v1472
    %v1474 = vpop.f32.mrb[0].mxu0
    %v1475 = vpop.f32.mrb[0].mxu0
    %v1476 = vadd.f32 %v767, %v1475
    %v1477 = vpop.f32.mrb[0].mxu0
    %1478 = vmatprep.mubr.bf16.mxu0 0
    %1479 = vmatmul.mubr.bf16.gmra.mrb[0].mxu0 %v879
    %v1480 = vpop.f32.mrb[0].mxu0
    %v1481 = vadd.f32 %v767, %v1480
    %v1482 = vpop.f32.mrb[0].mxu0
    %v1483 = vpop.f32.mrb[0].mxu0
    %v1484 = vadd.f32 %v767, %v1483
    %v1485 = vpop.f32.mrb[0].mxu0
    %1486 = vmatprep.mubr.bf16.mxu0 0
    %1487 = vmatmul.mubr.bf16.gmra.mrb[0].mxu0 %v882
    %v1488 = vpop.f32.mrb[0].mxu0
    %v1489 = vadd.f32 %v767, %v1488
    %v1490 = vpop.f32.mrb[0].mxu0
    %v1491 = vpop.f32.mrb[0].mxu0
    %v1492 = vadd.f32 %v767, %v1491
    %v1493 = vpop.f32.mrb[0].mxu0
    %1494 = vmatprep.mubr.bf16.mxu0 0
    %1495 = vmatmul.mubr.bf16.gmra.mrb[0].mxu0 %v885
    %v1496 = vpop.f32.mrb[0].mxu0
    %v1497 = vadd.f32 %v767, %v1496
    %v1498 = vpop.f32.mrb[0].mxu0
    %v1499 = vpop.f32.mrb[0].mxu0
    %v1500 = vadd.f32 %v767, %v1499
    %v1501 = vpop.f32.mrb[0].mxu0
    %1502 = vmatprep.mubr.bf16.mxu0 0
    %1503 = vmatmul.mubr.bf16.gmra.mrb[0].mxu0 %v888
    %v1504 = vpop.f32.mrb[0].mxu0
    %v1505 = vadd.f32 %v767, %v1504
    %v1506 = vpop.f32.mrb[0].mxu0
    %v1507 = vpop.f32.mrb[0].mxu0
    %v1508 = vadd.f32 %v767, %v1507
    %v1509 = vpop.f32.mrb[0].mxu0
    %1510 = vmatprep.mubr.bf16.mxu0 0
    %1511 = vmatmul.mubr.bf16.gmra.mrb[0].mxu0 %v891
    %v1512 = vpop.f32.mrb[0].mxu0
    %v1513 = vadd.f32 %v767, %v1512
    %v1514 = vpop.f32.mrb[0].mxu0
    %v1515 = vpop.f32.mrb[0].mxu0
    %v1516 = vadd.f32 %v767, %v1515
    %v1517 = vpop.f32.mrb[0].mxu0
    %1518 = vmatprep.mubr.bf16.mxu0 0
    %1519 = vmatmul.mubr.bf16.gmra.mrb[0].mxu0 %v894
    %v1520 = vpop.f32.mrb[0].mxu0
    %v1521 = vadd.f32 %v767, %v1520
    %v1522 = vpop.f32.mrb[0].mxu0
    %v1523 = vpop.f32.mrb[0].mxu0
    %v1524 = vadd.f32 %v767, %v1523
    %v1525 = vpop.f32.mrb[0].mxu0
    %1526 = vmatprep.mubr.bf16.mxu0 0
    %1527 = vmatmul.mubr.bf16.gmra.mrb[0].mxu0 %v897
    %v1528 = vpop.f32.mrb[0].mxu0
    %v1529 = vadd.f32 %v767, %v1528
    %v1530 = vpop.f32.mrb[0].mxu0
    %v1531 = vpop.f32.mrb[0].mxu0
    %v1532 = vadd.f32 %v767, %v1531
    %v1533 = vpop.f32.mrb[0].mxu0
    %1534 = vmatprep.mubr.bf16.mxu0 0
    %1535 = vmatmul.mubr.bf16.gmra.mrb[0].mxu0 %v900
    %v1536 = vpop.f32.mrb[0].mxu0
    %v1537 = vadd.f32 %v767, %v1536
    %v1538 = vpop.f32.mrb[0].mxu0
    %v1539 = vpop.f32.mrb[0].mxu0
    %v1540 = vadd.f32 %v767, %v1539
    %v1541 = vpop.f32.mrb[0].mxu0
    %1542 = vmatprep.mubr.bf16.mxu0 0
    %1543 = vmatmul.mubr.bf16.gmra.mrb[0].mxu0 %v903
    %v1544 = vpop.f32.mrb[0].mxu0
    %v1545 = vadd.f32 %v767, %v1544
    %v1546 = vpop.f32.mrb[0].mxu0
    %v1547 = vpop.f32.mrb[0].mxu0
    %v1548 = vadd.f32 %v767, %v1547
    %v1549 = vpop.f32.mrb[0].mxu0
    %1550 = vmatprep.mubr.bf16.mxu0 0
    %1551 = vmatmul.mubr.bf16.gmra.mrb[0].mxu0 %v906
    %v1552 = vpop.f32.mrb[0].mxu0
    %v1553 = vadd.f32 %v767, %v1552
    %v1554 = vpop.f32.mrb[0].mxu0
    %v1555 = vpop.f32.mrb[0].mxu0
    %v1556 = vadd.f32 %v767, %v1555
    %v1557 = vpop.f32.mrb[0].mxu0
    %1558 = vmatprep.mubr.bf16.mxu0 0
    %1559 = vmatmul.mubr.bf16.gmra.mrb[0].mxu0 %v909
    %v1560 = vpop.f32.mrb[0].mxu0
    %v1561 = vadd.f32 %v767, %v1560
    %v1562 = vpop.f32.mrb[0].mxu0
    %v1563 = vpop.f32.mrb[0].mxu0
    %v1564 = vadd.f32 %v767, %v1563
    %v1565 = vpop.f32.mrb[0].mxu0
    %1566 = vmatprep.mubr.bf16.mxu0 0
    %1567 = vmatmul.mubr.bf16.gmra.mrb[0].mxu0 %v912
    %v1568 = vpop.f32.mrb[0].mxu0
    %v1569 = vadd.f32 %v767, %v1568
    %v1570 = vpop.f32.mrb[0].mxu0
    %v1571 = vpop.f32.mrb[0].mxu0
    %v1572 = vadd.f32 %v767, %v1571
    %v1573 = vpop.f32.mrb[0].mxu0
    %1574 = vmatprep.mubr.bf16.mxu0 0
    %1575 = vmatmul.mubr.bf16.gmra.mrb[0].mxu0 %v915
    %v1576 = vpop.f32.mrb[0].mxu0
    %v1577 = vadd.f32 %v767, %v1576
    %v1578 = vpop.f32.mrb[0].mxu0
    %v1579 = vpop.f32.mrb[0].mxu0
    %v1580 = vadd.f32 %v767, %v1579
    %v1581 = vpop.f32.mrb[0].mxu0
    %1582 = vmatprep.mubr.bf16.mxu0 0
    %1583 = vmatmul.mubr.bf16.gmra.mrb[0].mxu0 %v918
    %v1584 = vpop.f32.mrb[0].mxu0
    %v1585 = vadd.f32 %v767, %v1584
    %v1586 = vpop.f32.mrb[0].mxu0
    %v1587 = vpop.f32.mrb[0].mxu0
    %v1588 = vadd.f32 %v767, %v1587
    %v1589 = vpop.f32.mrb[0].mxu0
    %1590 = vmatprep.mubr.bf16.mxu0 0
    %1591 = vmatmul.mubr.bf16.gmra.mrb[0].mxu0 %v921
    %v1592 = vpop.f32.mrb[0].mxu0
    %v1593 = vadd.f32 %v767, %v1592
    %v1594 = vpop.f32.mrb[0].mxu0
    %v1595 = vpop.f32.mrb[0].mxu0
    %v1596 = vadd.f32 %v767, %v1595
    %v1597 = vpop.f32.mrb[0].mxu0
    %1598 = vmatprep.mubr.bf16.mxu0 0
    %1599 = vmatmul.mubr.bf16.gmra.mrb[0].mxu0 %v924
    %v1600 = vpop.f32.mrb[0].mxu0
    %v1601 = vadd.f32 %v767, %v1600
    %v1602 = vpop.f32.mrb[0].mxu0
    %v1603 = vpop.f32.mrb[0].mxu0
    %v1604 = vadd.f32 %v767, %v1603
    %v1605 = vpop.f32.mrb[0].mxu0
    %1606 = vmatprep.mubr.bf16.mxu0 0
    %1607 = vmatmul.mubr.bf16.gmra.mrb[0].mxu0 %v927
    %v1608 = vpop.f32.mrb[0].mxu0
    %v1609 = vadd.f32 %v767, %v1608
    %v1610 = vpop.f32.mrb[0].mxu0
    %v1611 = vpop.f32.mrb[0].mxu0
    %v1612 = vadd.f32 %v767, %v1611
    %v1613 = vpop.f32.mrb[0].mxu0
    %1614 = vmatprep.mubr.bf16.mxu0 0
    %1615 = vmatmul.mubr.bf16.gmra.mrb[0].mxu0 %v930
    %v1616 = vpop.f32.mrb[0].mxu0
    %v1617 = vadd.f32 %v767, %v1616
    %v1618 = vpop.f32.mrb[0].mxu0
    %v1619 = vpop.f32.mrb[0].mxu0
    %v1620 = vadd.f32 %v767, %v1619
    %v1621 = vpop.f32.mrb[0].mxu0
    %1622 = vmatprep.mubr.bf16.mxu0 0
    %1623 = vmatmul.mubr.bf16.gmra.mrb[0].mxu0 %v933
    %v1624 = vpop.f32.mrb[0].mxu0
    %v1625 = vadd.f32 %v767, %v1624
    %v1626 = vpop.f32.mrb[0].mxu0
    %v1627 = vpop.f32.mrb[0].mxu0
    %v1628 = vadd.f32 %v767, %v1627
    %v1629 = vpop.f32.mrb[0].mxu0
    %1630 = vmatprep.mubr.bf16.mxu0 0
    %1631 = vmatmul.mubr.bf16.gmra.mrb[0].mxu0 %v936
    %v1632 = vpop.f32.mrb[0].mxu0
    %v1633 = vadd.f32 %v767, %v1632
    %v1634 = vpop.f32.mrb[0].mxu0
    %v1635 = vpop.f32.mrb[0].mxu0
    %v1636 = vadd.f32 %v767, %v1635
    %v1637 = vpop.f32.mrb[0].mxu0
    %1638 = vmatprep.mubr.bf16.mxu0 0
    %1639 = vmatmul.mubr.bf16.gmra.mrb[0].mxu0 %v939
    %v1640 = vpop.f32.mrb[0].mxu0
    %v1641 = vadd.f32 %v767, %v1640
    %v1642 = vpop.f32.mrb[0].mxu0
    %v1643 = vpop.f32.mrb[0].mxu0
    %v1644 = vadd.f32 %v767, %v1643
    %v1645 = vpop.f32.mrb[0].mxu0
    %1646 = vmatprep.mubr.bf16.mxu0 0
    %1647 = vmatmul.mubr.bf16.gmra.mrb[0].mxu0 %v942
    %v1648 = vpop.f32.mrb[0].mxu0
    %v1649 = vadd.f32 %v767, %v1648
    %v1650 = vpop.f32.mrb[0].mxu0
    %v1651 = vpop.f32.mrb[0].mxu0
    %v1652 = vadd.f32 %v767, %v1651
    %v1653 = vpop.f32.mrb[0].mxu0
    %1654 = vmatprep.mubr.bf16.mxu0 0
    %1655 = vmatmul.mubr.bf16.gmra.mrb[0].mxu0 %v945
    %v1656 = vpop.f32.mrb[0].mxu0
    %v1657 = vadd.f32 %v767, %v1656
    %v1658 = vpop.f32.mrb[0].mxu0
    %v1659 = vpop.f32.mrb[0].mxu0
    %v1660 = vadd.f32 %v767, %v1659
    %v1661 = vpop.f32.mrb[0].mxu0
    %1662 = vmatprep.mubr.bf16.mxu0 0
    %1663 = vmatmul.mubr.bf16.gmra.mrb[0].mxu0 %v948
    %v1664 = vpop.f32.mrb[0].mxu0
    %v1665 = vadd.f32 %v767, %v1664
    %v1666 = vpop.f32.mrb[0].mxu0
    %v1667 = vpop.f32.mrb[0].mxu0
    %v1668 = vadd.f32 %v767, %v1667
    %v1669 = vpop.f32.mrb[0].mxu0
    %1670 = vmatprep.mubr.bf16.mxu0 0
    %1671 = vmatmul.mubr.bf16.gmra.mrb[0].mxu0 %v951
    %v1672 = vpop.f32.mrb[0].mxu0
    %v1673 = vadd.f32 %v767, %v1672
    %v1674 = vpop.f32.mrb[0].mxu0
    %v1675 = vpop.f32.mrb[0].mxu0
    %v1676 = vadd.f32 %v767, %v1675
    %v1677 = vpop.f32.mrb[0].mxu0
    %1678 = vmatprep.mubr.bf16.mxu0 0
    %1679 = vmatmul.mubr.bf16.gmra.mrb[0].mxu0 %v954
    %v1680 = vpop.f32.mrb[0].mxu0
    %v1681 = vadd.f32 %v767, %v1680
    %v1682 = vpop.f32.mrb[0].mxu0
    %v1683 = vpop.f32.mrb[0].mxu0
    %v1684 = vadd.f32 %v767, %v1683
    %v1685 = vpop.f32.mrb[0].mxu0
    %1686 = vmatprep.mubr.bf16.mxu0 0
    %1687 = vmatmul.mubr.bf16.gmra.mrb[0].mxu0 %v957
    %v1688 = vpop.f32.mrb[0].mxu0
    %v1689 = vadd.f32 %v767, %v1688
    %v1690 = vpop.f32.mrb[0].mxu0
    %v1691 = vpop.f32.mrb[0].mxu0
    %v1692 = vadd.f32 %v767, %v1691
    %v1693 = vpop.f32.mrb[0].mxu0
    %1694 = vmatprep.mubr.bf16.mxu0 0
    %1695 = vmatmul.mubr.bf16.gmra.mrb[0].mxu0 %v960
    %v1696 = vpop.f32.mrb[0].mxu0
    %v1697 = vadd.f32 %v767, %v1696
    %v1698 = vpop.f32.mrb[0].mxu0
    %v1699 = vpop.f32.mrb[0].mxu0
    %v1700 = vadd.f32 %v767, %v1699
    %v1701 = vpop.f32.mrb[0].mxu0
    %1702 = vmatprep.mubr.bf16.mxu0 0
    %1703 = vmatmul.mubr.bf16.gmra.mrb[0].mxu0 %v963
    %v1704 = vpop.f32.mrb[0].mxu0
    %v1705 = vadd.f32 %v767, %v1704
    %v1706 = vpop.f32.mrb[0].mxu0
    %v1707 = vpop.f32.mrb[0].mxu0
    %v1708 = vadd.f32 %v767, %v1707
    %v1709 = vpop.f32.mrb[0].mxu0
    %1710 = vmatprep.mubr.bf16.mxu0 0
    %1711 = vmatmul.mubr.bf16.gmra.mrb[0].mxu0 %v966
    %v1712 = vpop.f32.mrb[0].mxu0
    %v1713 = vadd.f32 %v767, %v1712
    %v1714 = vpop.f32.mrb[0].mxu0
    %v1715 = vpop.f32.mrb[0].mxu0
    %v1716 = vadd.f32 %v767, %v1715
    %v1717 = vpop.f32.mrb[0].mxu0
    %1718 = vmatprep.mubr.bf16.mxu0 0
    %1719 = vmatmul.mubr.bf16.gmra.mrb[0].mxu0 %v969
    %v1720 = vpop.f32.mrb[0].mxu0
    %v1721 = vadd.f32 %v767, %v1720
    %v1722 = vpop.f32.mrb[0].mxu0
    %v1723 = vpop.f32.mrb[0].mxu0
    %v1724 = vadd.f32 %v767, %v1723
    %v1725 = vpop.f32.mrb[0].mxu0
    %1726 = vmatprep.mubr.bf16.mxu0 0
    %1727 = vmatmul.mubr.bf16.gmra.mrb[0].mxu0 %v972
    %v1728 = vpop.f32.mrb[0].mxu0
    %v1729 = vadd.f32 %v767, %v1728
    %v1730 = vpop.f32.mrb[0].mxu0
    %v1731 = vpop.f32.mrb[0].mxu0
    %v1732 = vadd.f32 %v767, %v1731
    %v1733 = vpop.f32.mrb[0].mxu0
    %1734 = vmatprep.mubr.bf16.mxu0 0
    %1735 = vmatmul.mubr.bf16.gmra.mrb[0].mxu0 %v975
    %v1736 = vpop.f32.mrb[0].mxu0
    %v1737 = vadd.f32 %v767, %v1736
    %v1738 = vpop.f32.mrb[0].mxu0
    %v1739 = vpop.f32.mrb[0].mxu0
    %v1740 = vadd.f32 %v767, %v1739
    %v1741 = vpop.f32.mrb[0].mxu0
    %1742 = vmatprep.mubr.bf16.mxu0 0
    %1743 = vmatmul.mubr.bf16.gmra.mrb[0].mxu0 %v978
    %v1744 = vpop.f32.mrb[0].mxu0
    %v1745 = vadd.f32 %v767, %v1744
    %v1746 = vpop.f32.mrb[0].mxu0
    %v1747 = vpop.f32.mrb[0].mxu0
    %v1748 = vadd.f32 %v767, %v1747
    %v1749 = vpop.f32.mrb[0].mxu0
    %1750 = vmatprep.mubr.bf16.mxu0 0
    %1751 = vmatmul.mubr.bf16.gmra.mrb[0].mxu0 %v981
    %v1752 = vpop.f32.mrb[0].mxu0
    %v1753 = vadd.f32 %v767, %v1752
    %v1754 = vpop.f32.mrb[0].mxu0
    %v1755 = vpop.f32.mrb[0].mxu0
    %v1756 = vadd.f32 %v767, %v1755
    %v1757 = vpop.f32.mrb[0].mxu0
    %1758 = vmatprep.mubr.bf16.mxu0 0
    %1759 = vmatmul.mubr.bf16.gmra.mrb[0].mxu0 %v984
    %v1760 = vpop.f32.mrb[0].mxu0
    %v1761 = vadd.f32 %v767, %v1760
    %v1762 = vpop.f32.mrb[0].mxu0
    %v1763 = vpop.f32.mrb[0].mxu0
    %v1764 = vadd.f32 %v767, %v1763
    %v1765 = vpop.f32.mrb[0].mxu0
    %1766 = vmatprep.mubr.bf16.mxu0 0
    %1767 = vmatmul.mubr.bf16.gmra.mrb[0].mxu0 %v987
    %v1768 = vpop.f32.mrb[0].mxu0
    %v1769 = vadd.f32 %v767, %v1768
    %v1770 = vpop.f32.mrb[0].mxu0
    %v1771 = vpop.f32.mrb[0].mxu0
    %v1772 = vadd.f32 %v767, %v1771
    %v1773 = vpop.f32.mrb[0].mxu0
    %1774 = vmatprep.mubr.bf16.mxu0 0
    %1775 = vmatmul.mubr.bf16.gmra.mrb[0].mxu0 %v990
    %v1776 = vpop.f32.mrb[0].mxu0
    %v1777 = vadd.f32 %v767, %v1776
    %v1778 = vpop.f32.mrb[0].mxu0
    %v1779 = vpop.f32.mrb[0].mxu0
    %v1780 = vadd.f32 %v767, %v1779
    %v1781 = vpop.f32.mrb[0].mxu0
    %1782 = vmatprep.mubr.bf16.mxu0 0
    %1783 = vmatmul.mubr.bf16.gmra.mrb[0].mxu0 %v993
    %v1784 = vpop.f32.mrb[0].mxu0
    %v1785 = vadd.f32 %v767, %v1784
    %v1786 = vpop.f32.mrb[0].mxu0
    %v1787 = vpop.f32.mrb[0].mxu0
    %v1788 = vadd.f32 %v767, %v1787
    %v1789 = vpop.f32.mrb[0].mxu0
    %1790 = vmatprep.mubr.bf16.mxu0 0
    %1791 = vmatmul.mubr.bf16.gmra.mrb[0].mxu0 %v996
    %v1792 = vpop.f32.mrb[0].mxu0
    %v1793 = vadd.f32 %v767, %v1792
    %v1794 = vpop.f32.mrb[0].mxu0
    %v1795 = vpop.f32.mrb[0].mxu0
    %v1796 = vadd.f32 %v767, %v1795
    %v1797 = vpop.f32.mrb[0].mxu0
    %1798 = vmatprep.mubr.bf16.mxu0 0
    %1799 = vmatmul.mubr.bf16.gmra.mrb[0].mxu0 %v999
    %v1800 = vpop.f32.mrb[0].mxu0
    %v1801 = vadd.f32 %v767, %v1800
    %v1802 = vpop.f32.mrb[0].mxu0
    %v1803 = vpop.f32.mrb[0].mxu0
    %v1804 = vadd.f32 %v767, %v1803
    %v1805 = vpop.f32.mrb[0].mxu0
    %1806 = vmatprep.mubr.bf16.mxu0 0
    %1807 = vmatmul.mubr.bf16.gmra.mrb[0].mxu0 %v1002
    %v1808 = vpop.f32.mrb[0].mxu0
    %v1809 = vadd.f32 %v767, %v1808
    %v1810 = vpop.f32.mrb[0].mxu0
    %v1811 = vpop.f32.mrb[0].mxu0
    %v1812 = vadd.f32 %v767, %v1811
    %v1813 = vpop.f32.mrb[0].mxu0
    %1814 = vmatprep.mubr.bf16.mxu0 0
    %1815 = vmatmul.mubr.bf16.gmra.mrb[0].mxu0 %v1005
    %v1816 = vpop.f32.mrb[0].mxu0
    %v1817 = vadd.f32 %v767, %v1816
    %v1818 = vpop.f32.mrb[0].mxu0
    %v1819 = vpop.f32.mrb[0].mxu0
    %v1820 = vadd.f32 %v767, %v1819
    %v1821 = vpop.f32.mrb[0].mxu0
    %1822 = vmatprep.mubr.bf16.mxu0 0
    %1823 = vmatmul.mubr.bf16.gmra.mrb[0].mxu0 %v1008
    %v1824 = vpop.f32.mrb[0].mxu0
    %v1825 = vadd.f32 %v767, %v1824
    %v1826 = vpop.f32.mrb[0].mxu0
    %v1827 = vpop.f32.mrb[0].mxu0
    %v1828 = vadd.f32 %v767, %v1827
    %v1829 = vpop.f32.mrb[0].mxu0
    %1830 = vmatprep.mubr.bf16.mxu0 0
    %1831 = vmatmul.mubr.bf16.gmra.mrb[0].mxu0 %v1011
    %v1832 = vpop.f32.mrb[0].mxu0
    %v1833 = vadd.f32 %v767, %v1832
    %v1834 = vpop.f32.mrb[0].mxu0
    %v1835 = vpop.f32.mrb[0].mxu0
    %v1836 = vadd.f32 %v767, %v1835
    %v1837 = vpop.f32.mrb[0].mxu0
    %1838 = vmatprep.mubr.bf16.mxu0 0
    %1839 = vmatmul.mubr.bf16.gmra.mrb[0].mxu0 %v1014
    %v1840 = vpop.f32.mrb[0].mxu0
    %v1841 = vadd.f32 %v767, %v1840
    %v1842 = vpop.f32.mrb[0].mxu0
    %v1843 = vpop.f32.mrb[0].mxu0
    %v1844 = vadd.f32 %v767, %v1843
    %v1845 = vpop.f32.mrb[0].mxu0
    %1846 = vmatprep.mubr.bf16.mxu0 0
    %1847 = vmatmul.mubr.bf16.gmra.mrb[0].mxu0 %v1017
    %v1848 = vpop.f32.mrb[0].mxu0
    %v1849 = vadd.f32 %v767, %v1848
    %v1850 = vpop.f32.mrb[0].mxu0
    %v1851 = vpop.f32.mrb[0].mxu0
    %v1852 = vadd.f32 %v767, %v1851
    %v1853 = vpop.f32.mrb[0].mxu0
    %1854 = vmatprep.mubr.bf16.mxu0 0
    %1855 = vmatmul.mubr.bf16.gmra.mrb[0].mxu0 %v1020
    %v1856 = vpop.f32.mrb[0].mxu0
    %v1857 = vadd.f32 %v767, %v1856
    %v1858 = vpop.f32.mrb[0].mxu0
    %v1859 = vpop.f32.mrb[0].mxu0
    %v1860 = vadd.f32 %v767, %v1859
    %v1861 = vpop.f32.mrb[0].mxu0
    %1862 = vmatprep.mubr.bf16.mxu0 0
    %1863 = vmatmul.mubr.bf16.gmra.mrb[0].mxu0 %v1023
    %v1864 = vpop.f32.mrb[0].mxu0
    %v1865 = vadd.f32 %v767, %v1864
    %v1866 = vpop.f32.mrb[0].mxu0
    %v1867 = vpop.f32.mrb[0].mxu0
    %v1868 = vadd.f32 %v767, %v1867
    %v1869 = vpop.f32.mrb[0].mxu0
    %1870 = vmatprep.mubr.bf16.mxu0 0
    %1871 = vmatmul.mubr.bf16.gmra.mrb[0].mxu0 %v1026
    %v1872 = vpop.f32.mrb[0].mxu0
    %v1873 = vadd.f32 %v767, %v1872
    %v1874 = vpop.f32.mrb[0].mxu0
    %v1875 = vpop.f32.mrb[0].mxu0
    %v1876 = vadd.f32 %v767, %v1875
    %v1877 = vpop.f32.mrb[0].mxu0
    %1878 = vmatprep.mubr.bf16.mxu0 0
    %1879 = vmatmul.mubr.bf16.gmra.mrb[0].mxu0 %v1029
    %v1880 = vpop.f32.mrb[0].mxu0
    %v1881 = vadd.f32 %v767, %v1880
    %v1882 = vpop.f32.mrb[0].mxu0
    %v1883 = vpop.f32.mrb[0].mxu0
    %v1884 = vadd.f32 %v767, %v1883
    %v1885 = vpop.f32.mrb[0].mxu0
    %1886 = vmatprep.mubr.bf16.mxu0 0
    %1887 = vmatmul.mubr.bf16.gmra.mrb[0].mxu0 %v1032
    %v1888 = vpop.f32.mrb[0].mxu0
    %v1889 = vadd.f32 %v767, %v1888
    %v1890 = vpop.f32.mrb[0].mxu0
    %v1891 = vpop.f32.mrb[0].mxu0
    %v1892 = vadd.f32 %v767, %v1891
    %v1893 = vpop.f32.mrb[0].mxu0
    %1894 = vmatprep.mubr.bf16.mxu0 0
    %1895 = vmatmul.mubr.bf16.gmra.mrb[0].mxu0 %v1035
    %v1896 = vpop.f32.mrb[0].mxu0
    %v1897 = vadd.f32 %v767, %v1896
    %v1898 = vpop.f32.mrb[0].mxu0
    %v1899 = vpop.f32.mrb[0].mxu0
    %v1900 = vadd.f32 %v767, %v1899
    %v1901 = vpop.f32.mrb[0].mxu0
    %1902 = vmatprep.mubr.bf16.mxu0 0
    %1903 = vmatmul.mubr.bf16.gmra.mrb[0].mxu0 %v1038
    %v1904 = vpop.f32.mrb[0].mxu0
    %v1905 = vadd.f32 %v767, %v1904
    %v1906 = vpop.f32.mrb[0].mxu0
    %v1907 = vpop.f32.mrb[0].mxu0
    %v1908 = vadd.f32 %v767, %v1907
    %v1909 = vpop.f32.mrb[0].mxu0
    %1910 = vmatprep.mubr.bf16.mxu0 0
    %1911 = vmatmul.mubr.bf16.gmra.mrb[0].mxu0 %v1041
    %v1912 = vpop.f32.mrb[0].mxu0
    %v1913 = vadd.f32 %v767, %v1912
    %v1914 = vpop.f32.mrb[0].mxu0
    %v1915 = vpop.f32.mrb[0].mxu0
    %v1916 = vadd.f32 %v767, %v1915
    %v1917 = vpop.f32.mrb[0].mxu0
    %1918 = vmatprep.mubr.bf16.mxu0 0
    %1919 = vmatmul.mubr.bf16.gmra.mrb[0].mxu0 %v1044
    %v1920 = vpop.f32.mrb[0].mxu0
    %v1921 = vadd.f32 %v767, %v1920
    %v1922 = vpop.f32.mrb[0].mxu0
    %v1923 = vpop.f32.mrb[0].mxu0
    %v1924 = vadd.f32 %v767, %v1923
    %v1925 = vpop.f32.mrb[0].mxu0
    %1926 = vmatprep.mubr.bf16.mxu0 0
    %1927 = vmatmul.mubr.bf16.gmra.mrb[0].mxu0 %v1047
    %v1928 = vpop.f32.mrb[0].mxu0
    %v1929 = vadd.f32 %v767, %v1928
    %v1930 = vpop.f32.mrb[0].mxu0
    %v1931 = vpop.f32.mrb[0].mxu0
    %v1932 = vadd.f32 %v767, %v1931
    %v1933 = vpop.f32.mrb[0].mxu0
    %1934 = vmatprep.mubr.bf16.mxu0 0
    %1935 = vmatmul.mubr.bf16.gmra.mrb[0].mxu0 %v1050
    %v1936 = vpop.f32.mrb[0].mxu0
    %v1937 = vadd.f32 %v767, %v1936
    %v1938 = vpop.f32.mrb[0].mxu0
    %v1939 = vpop.f32.mrb[0].mxu0
    %v1940 = vadd.f32 %v767, %v1939
    %v1941 = vpop.f32.mrb[0].mxu0
    %1942 = vmatprep.mubr.bf16.mxu0 0
    %1943 = vmatmul.mubr.bf16.gmra.mrb[0].mxu0 %v1053
    %v1944 = vpop.f32.mrb[0].mxu0
    %v1945 = vadd.f32 %v767, %v1944
    %v1946 = vpop.f32.mrb[0].mxu0
    %v1947 = vpop.f32.mrb[0].mxu0
    %v1948 = vadd.f32 %v767, %v1947
    %v1949 = vpop.f32.mrb[0].mxu0
    %1950 = vmatprep.mubr.bf16.mxu0 0
    %1951 = vmatmul.mubr.bf16.gmra.mrb[0].mxu0 %v1056
    %v1952 = vpop.f32.mrb[0].mxu0
    %v1953 = vadd.f32 %v767, %v1952
    %v1954 = vpop.f32.mrb[0].mxu0
    %v1955 = vpop.f32.mrb[0].mxu0
    %v1956 = vadd.f32 %v767, %v1955
    %v1957 = vpop.f32.mrb[0].mxu0
    %1958 = vmatprep.mubr.bf16.mxu0 0
    %1959 = vmatmul.mubr.bf16.gmra.mrb[0].mxu0 %v1059
    %v1960 = vpop.f32.mrb[0].mxu0
    %v1961 = vadd.f32 %v767, %v1960
    %v1962 = vpop.f32.mrb[0].mxu0
    %v1963 = vpop.f32.mrb[0].mxu0
    %v1964 = vadd.f32 %v767, %v1963
    %v1965 = vpop.f32.mrb[0].mxu0
    %1966 = vmatprep.mubr.bf16.mxu0 0
    %1967 = vmatmul.mubr.bf16.gmra.mrb[0].mxu0 %v1062
    %v1968 = vpop.f32.mrb[0].mxu0
    %v1969 = vadd.f32 %v767, %v1968
    %v1970 = vpop.f32.mrb[0].mxu0
    %v1971 = vpop.f32.mrb[0].mxu0
    %v1972 = vadd.f32 %v767, %v1971
    %v1973 = vpop.f32.mrb[0].mxu0
    %1974 = vmatprep.mubr.bf16.mxu0 0
    %1975 = vmatmul.mubr.bf16.gmra.mrb[0].mxu0 %v1065
    %v1976 = vpop.f32.mrb[0].mxu0
    %v1977 = vadd.f32 %v767, %v1976
    %v1978 = vpop.f32.mrb[0].mxu0
    %v1979 = vpop.f32.mrb[0].mxu0
    %v1980 = vadd.f32 %v767, %v1979
    %v1981 = vpop.f32.mrb[0].mxu0
    %1982 = vmatprep.mubr.bf16.mxu0 0
    %1983 = vmatmul.mubr.bf16.gmra.mrb[0].mxu0 %v1068
    %v1984 = vpop.f32.mrb[0].mxu0
    %v1985 = vadd.f32 %v767, %v1984
    %v1986 = vpop.f32.mrb[0].mxu0
    %v1987 = vpop.f32.mrb[0].mxu0
    %v1988 = vadd.f32 %v767, %v1987
    %v1989 = vpop.f32.mrb[0].mxu0
    %1990 = vmatprep.mubr.bf16.mxu0 0
    %1991 = vmatmul.mubr.bf16.gmra.mrb[0].mxu0 %v1071
    %v1992 = vpop.f32.mrb[0].mxu0
    %v1993 = vadd.f32 %v767, %v1992
    %v1994 = vpop.f32.mrb[0].mxu0
    %v1995 = vpop.f32.mrb[0].mxu0
    %v1996 = vadd.f32 %v767, %v1995
    %v1997 = vpop.f32.mrb[0].mxu0
    %1998 = vmatprep.mubr.bf16.mxu0 0
    %1999 = vmatmul.mubr.bf16.gmra.mrb[0].mxu0 %v1074
    %v2000 = vpop.f32.mrb[0].mxu0
    %v2001 = vadd.f32 %v767, %v2000
    %v2002 = vpop.f32.mrb[0].mxu0
    %v2003 = vpop.f32.mrb[0].mxu0
    %v2004 = vadd.f32 %v767, %v2003
    %v2005 = vpop.f32.mrb[0].mxu0
    %2006 = vmatprep.mubr.bf16.mxu0 0
    %2007 = vmatmul.mubr.bf16.gmra.mrb[0].mxu0 %v1077
    %v2008 = vpop.f32.mrb[0].mxu0
    %v2009 = vadd.f32 %v767, %v2008
    %v2010 = vpop.f32.mrb[0].mxu0
    %v2011 = vpop.f32.mrb[0].mxu0
    %v2012 = vadd.f32 %v767, %v2011
    %v2013 = vpop.f32.mrb[0].mxu0
    %2014 = vmatprep.mubr.bf16.mxu0 0
    %2015 = vmatmul.mubr.bf16.gmra.mrb[0].mxu0 %v1080
    %v2016 = vpop.f32.mrb[0].mxu0
    %v2017 = vadd.f32 %v767, %v2016
    %v2018 = vpop.f32.mrb[0].mxu0
    %v2019 = vpop.f32.mrb[0].mxu0
    %v2020 = vadd.f32 %v767, %v2019
    %v2021 = vpop.f32.mrb[0].mxu0
    %2022 = vmatprep.mubr.bf16.mxu0 0
    %2023 = vmatmul.mubr.bf16.gmra.mrb[0].mxu0 %v1083
    %v2024 = vpop.f32.mrb[0].mxu0
    %v2025 = vadd.f32 %v767, %v2024
    %v2026 = vpop.f32.mrb[0].mxu0
    %v2027 = vpop.f32.mrb[0].mxu0
    %v2028 = vadd.f32 %v767, %v2027
    %v2029 = vpop.f32.mrb[0].mxu0
    %2030 = vmatprep.mubr.bf16.mxu0 0
    %2031 = vmatmul.mubr.bf16.gmra.mrb[0].mxu0 %v1086
    %v2032 = vpop.f32.mrb[0].mxu0
    %v2033 = vadd.f32 %v767, %v2032
    %v2034 = vpop.f32.mrb[0].mxu0
    %v2035 = vpop.f32.mrb[0].mxu0
    %v2036 = vadd.f32 %v767, %v2035
    %v2037 = vpop.f32.mrb[0].mxu0
    %2038 = vmatprep.mubr.bf16.mxu0 0
    %2039 = vmatmul.mubr.bf16.gmra.mrb[0].mxu0 %v1089
    %v2040 = vpop.f32.mrb[0].mxu0
    %v2041 = vadd.f32 %v767, %v2040
    %v2042 = vpop.f32.mrb[0].mxu0
    %v2043 = vpop.f32.mrb[0].mxu0
    %v2044 = vadd.f32 %v767, %v2043
    %v2045 = vpop.f32.mrb[0].mxu0
    %2046 = vmatprep.mubr.bf16.mxu0 0
    %2047 = vmatmul.mubr.bf16.gmra.mrb[0].mxu0 %v1092
    %v2048 = vpop.f32.mrb[0].mxu0
    %v2049 = vadd.f32 %v767, %v2048
    %v2050 = vpop.f32.mrb[0].mxu0
    %v2051 = vpop.f32.mrb[0].mxu0
    %v2052 = vadd.f32 %v767, %v2051
    %v2053 = vpop.f32.mrb[0].mxu0
    %2054 = vmatprep.mubr.bf16.mxu0 0
    %2055 = vmatmul.mubr.bf16.gmra.mrb[0].mxu0 %v1095
    %v2056 = vpop.f32.mrb[0].mxu0
    %v2057 = vadd.f32 %v767, %v2056
    %v2058 = vpop.f32.mrb[0].mxu0
    %v2059 = vpop.f32.mrb[0].mxu0
    %v2060 = vadd.f32 %v767, %v2059
    %v2061 = vpop.f32.mrb[0].mxu0
    %2062 = vmatprep.mubr.bf16.mxu0 0
    %2063 = vmatmul.mubr.bf16.gmra.mrb[0].mxu0 %v1098
    %v2064 = vpop.f32.mrb[0].mxu0
    %v2065 = vadd.f32 %v767, %v2064
    %v2066 = vpop.f32.mrb[0].mxu0
    %v2067 = vpop.f32.mrb[0].mxu0
    %v2068 = vadd.f32 %v767, %v2067
    %v2069 = vpop.f32.mrb[0].mxu0
    %2070 = vmatprep.mubr.bf16.mxu0 0
    %2071 = vmatmul.mubr.bf16.gmra.mrb[0].mxu0 %v1101
    %v2072 = vpop.f32.mrb[0].mxu0
    %v2073 = vadd.f32 %v767, %v2072
    %v2074 = vpop.f32.mrb[0].mxu0
    %v2075 = vpop.f32.mrb[0].mxu0
    %v2076 = vadd.f32 %v767, %v2075
    %v2077 = vpop.f32.mrb[0].mxu0
    %2078 = vmatprep.mubr.bf16.mxu0 0
    %2079 = vmatmul.mubr.bf16.gmra.mrb[0].mxu0 %v1104
    %v2080 = vpop.f32.mrb[0].mxu0
    %v2081 = vadd.f32 %v767, %v2080
    %v2082 = vpop.f32.mrb[0].mxu0
    %v2083 = vpop.f32.mrb[0].mxu0
    %v2084 = vadd.f32 %v767, %v2083
    %v2085 = vpop.f32.mrb[0].mxu0
    %2086 = vmatprep.mubr.bf16.mxu0 0
    %2087 = vmatmul.mubr.bf16.gmra.mrb[0].mxu0 %v1107
    %v2088 = vpop.f32.mrb[0].mxu0
    %v2089 = vadd.f32 %v767, %v2088
    %v2090 = vpop.f32.mrb[0].mxu0
    %v2091 = vpop.f32.mrb[0].mxu0
    %v2092 = vadd.f32 %v767, %v2091
    %v2093 = vpop.f32.mrb[0].mxu0
    %2094 = vmatprep.mubr.bf16.mxu0 0
    %2095 = vmatmul.mubr.bf16.gmra.mrb[0].mxu0 %v1110
    %v2096 = vpop.f32.mrb[0].mxu0
    %v2097 = vadd.f32 %v767, %v2096
    %v2098 = vpop.f32.mrb[0].mxu0
    %v2099 = vpop.f32.mrb[0].mxu0
    %v2100 = vadd.f32 %v767, %v2099
    %v2101 = vpop.f32.mrb[0].mxu0
    %2102 = vmatprep.mubr.bf16.mxu0 0
    %2103 = vmatmul.mubr.bf16.gmra.mrb[0].mxu0 %v1113
    %v2104 = vpop.f32.mrb[0].mxu0
    %v2105 = vadd.f32 %v767, %v2104
    %v2106 = vpop.f32.mrb[0].mxu0
    %v2107 = vpop.f32.mrb[0].mxu0
    %v2108 = vadd.f32 %v767, %v2107
    %v2109 = vpop.f32.mrb[0].mxu0
    %2110 = vmatprep.mubr.bf16.mxu0 0
    %2111 = vmatmul.mubr.bf16.gmra.mrb[0].mxu0 %v1116
    %v2112 = vpop.f32.mrb[0].mxu0
    %v2113 = vadd.f32 %v767, %v2112
    %v2114 = vpop.f32.mrb[0].mxu0
    %v2115 = vpop.f32.mrb[0].mxu0
    %v2116 = vadd.f32 %v767, %v2115
    %v2117 = vpop.f32.mrb[0].mxu0
    %2118 = vmatprep.mubr.bf16.mxu0 0
    %2119 = vmatmul.mubr.bf16.gmra.mrb[0].mxu0 %v1119
    %v2120 = vpop.f32.mrb[0].mxu0
    %v2121 = vadd.f32 %v767, %v2120
    %v2122 = vpop.f32.mrb[0].mxu0
    %v2123 = vpop.f32.mrb[0].mxu0
    %v2124 = vadd.f32 %v767, %v2123
    %v2125 = vpop.f32.mrb[0].mxu0
    %2126 = vmatprep.mubr.bf16.mxu0 0
    %2127 = vmatmul.mubr.bf16.gmra.mrb[0].mxu0 %v1122
    %v2128 = vpop.f32.mrb[0].mxu0
    %v2129 = vadd.f32 %v767, %v2128
    %v2130 = vpop.f32.mrb[0].mxu0
    %v2131 = vpop.f32.mrb[0].mxu0
    %v2132 = vadd.f32 %v767, %v2131
    %v2133 = vpop.f32.mrb[0].mxu0
    %2134 = vmatprep.mubr.bf16.mxu0 0
    %2135 = vmatmul.mubr.bf16.gmra.mrb[0].mxu0 %v1125
    %v2136 = vpop.f32.mrb[0].mxu0
    %v2137 = vadd.f32 %v767, %v2136
    %v2138 = vpop.f32.mrb[0].mxu0
    %v2139 = vpop.f32.mrb[0].mxu0
    %v2140 = vadd.f32 %v767, %v2139
    %v2141 = vpop.f32.mrb[0].mxu0
    %2142 = vmatprep.mubr.bf16.mxu0 0
    %2143 = vmatmul.mubr.bf16.gmra.mrb[0].mxu0 %v1128
    %v2144 = vpop.f32.mrb[0].mxu0
    %v2145 = vadd.f32 %v767, %v2144
    %v2146 = vpop.f32.mrb[0].mxu0
    %v2147 = vpop.f32.mrb[0].mxu0
    %v2148 = vadd.f32 %v767, %v2147
    %v2149 = vpop.f32.mrb[0].mxu0
    %2150 = vmatprep.mubr.bf16.mxu0 0
    %2151 = vmatmul.mubr.bf16.gmra.mrb[0].mxu0 %v1131
    %v2152 = vpop.f32.mrb[0].mxu0
    %v2153 = vadd.f32 %v767, %v2152
    %v2154 = vpop.f32.mrb[0].mxu0
    %v2155 = vpop.f32.mrb[0].mxu0
    %v2156 = vadd.f32 %v767, %v2155
    %v2157 = vpop.f32.mrb[0].mxu0
    %2158 = vmatprep.mubr.bf16.mxu0 0
    %2159 = vmatmul.mubr.bf16.gmra.mrb[0].mxu0 %v1134
    %v2160 = vpop.f32.mrb[0].mxu0
    %v2161 = vadd.f32 %v767, %v2160
    %v2162 = vpop.f32.mrb[0].mxu0
    %v2163 = vpop.f32.mrb[0].mxu0
    %v2164 = vadd.f32 %v767, %v2163
    %v2165 = vpop.f32.mrb[0].mxu0
    %2166 = vmatprep.mubr.bf16.mxu0 0
    %2167 = vmatmul.mubr.bf16.gmra.mrb[0].mxu0 %v1137
    %v2168 = vpop.f32.mrb[0].mxu0
    %v2169 = vadd.f32 %v767, %v2168
    %v2170 = vpop.f32.mrb[0].mxu0
    %v2171 = vpop.f32.mrb[0].mxu0
    %v2172 = vadd.f32 %v767, %v2171
    %v2173 = vpop.f32.mrb[0].mxu0
    %2174 = vmatprep.mubr.bf16.mxu0 0
    %2175 = vmatmul.mubr.bf16.gmra.mrb[0].mxu0 %v1140
    %v2176 = vpop.f32.mrb[0].mxu0
    %v2177 = vadd.f32 %v767, %v2176
    %v2178 = vpop.f32.mrb[0].mxu0
    %v2179 = vpop.f32.mrb[0].mxu0
    %v2180 = vadd.f32 %v767, %v2179
    %v2181 = vpop.f32.mrb[0].mxu0
    %2182 = vmatprep.mubr.bf16.mxu0 0
    %2183 = vmatmul.mubr.bf16.gmra.mrb[0].mxu0 %v1143
    %v2184 = vpop.f32.mrb[0].mxu0
    %v2185 = vadd.f32 %v767, %v2184
    %v2186 = vpop.f32.mrb[0].mxu0
    %v2187 = vpop.f32.mrb[0].mxu0
    %v2188 = vadd.f32 %v767, %v2187
    %v2189 = vpop.f32.mrb[0].mxu0
    %2190 = vmatprep.mubr.bf16.mxu0 0
    %2191 = vmatmul.mubr.bf16.gmra.mrb[0].mxu0 %v1146
    %v2192 = vpop.f32.mrb[0].mxu0
    %v2193 = vadd.f32 %v767, %v2192
    %v2194 = vpop.f32.mrb[0].mxu0
    %v2195 = vpop.f32.mrb[0].mxu0
    %v2196 = vadd.f32 %v767, %v2195
    %v2197 = vpop.f32.mrb[0].mxu0
    %2198 = vmatprep.mubr.bf16.mxu0 0
    %2199 = vmatmul.mubr.bf16.gmra.mrb[0].mxu0 %v1149
    %v2200 = vpop.f32.mrb[0].mxu0
    %v2201 = vadd.f32 %v767, %v2200
    %v2202 = vpop.f32.mrb[0].mxu0
    %v2203 = vpop.f32.mrb[0].mxu0
    %v2204 = vadd.f32 %v767, %v2203
    %v2205 = vpop.f32.mrb[0].mxu0
    %2206 = vmatprep.mubr.bf16.mxu0 0
    %2207 = vmatmul.mubr.bf16.gmra.mrb[0].mxu0 %v1152
    %v2208 = vpop.f32.mrb[0].mxu0
    %v2209 = vadd.f32 %v767, %v2208
    %v2210 = vpop.f32.mrb[0].mxu0
    %v2211 = vpop.f32.mrb[0].mxu0
    %v2212 = vadd.f32 %v767, %v2211
    %v2213 = vpop.f32.mrb[0].mxu0
    %2214 = vdwg.mxu0
    %v2215 = vmax.f32 %v1193, 0.0
    %v2216 = vmax.f32 %v1196, 0.0
    %v2217 = vmax.f32 %v1201, 0.0
    %v2218 = vmax.f32 %v1204, 0.0
    %v2219 = vmax.f32 %v1209, 0.0
    %v2220 = vmax.f32 %v1212, 0.0
    %v2221 = vmax.f32 %v1217, 0.0
    %v2222 = vmax.f32 %v1220, 0.0
    %v2223 = vmax.f32 %v1225, 0.0
    %v2224 = vmax.f32 %v1228, 0.0
    %v2225 = vmax.f32 %v1233, 0.0
    %v2226 = vmax.f32 %v1236, 0.0
    %v2227 = vmax.f32 %v1241, 0.0
    %v2228 = vmax.f32 %v1244, 0.0
    %v2229 = vmax.f32 %v1249, 0.0
    %v2230 = vmax.f32 %v1252, 0.0
    %v2231 = vmax.f32 %v1257, 0.0
    %v2232 = vmax.f32 %v1260, 0.0
    %v2233 = vmax.f32 %v1265, 0.0
    %v2234 = vmax.f32 %v1268, 0.0
    %v2235 = vmax.f32 %v1273, 0.0
    %v2236 = vmax.f32 %v1276, 0.0
    %v2237 = vmax.f32 %v1281, 0.0
    %v2238 = vmax.f32 %v1284, 0.0
    %v2239 = vmax.f32 %v1289, 0.0
    %v2240 = vmax.f32 %v1292, 0.0
    %v2241 = vmax.f32 %v1297, 0.0
    %v2242 = vmax.f32 %v1300, 0.0
    %v2243 = vmax.f32 %v1305, 0.0
    %v2244 = vmax.f32 %v1308, 0.0
    %v2245 = vmax.f32 %v1313, 0.0
    %v2246 = vmax.f32 %v1316, 0.0
    %v2247 = vmax.f32 %v1321, 0.0
    %v2248 = vmax.f32 %v1324, 0.0
    %v2249 = vmax.f32 %v1329, 0.0
    %v2250 = vmax.f32 %v1332, 0.0
    %v2251 = vmax.f32 %v1337, 0.0
    %v2252 = vmax.f32 %v1340, 0.0
    %v2253 = vmax.f32 %v1345, 0.0
    %v2254 = vmax.f32 %v1348, 0.0
    %v2255 = vmax.f32 %v1353, 0.0
    %v2256 = vmax.f32 %v1356, 0.0
    %v2257 = vmax.f32 %v1361, 0.0
    %v2258 = vmax.f32 %v1364, 0.0
    %v2259 = vmax.f32 %v1369, 0.0
    %v2260 = vmax.f32 %v1372, 0.0
    %v2261 = vmax.f32 %v1377, 0.0
    %v2262 = vmax.f32 %v1380, 0.0
    %v2263 = vmax.f32 %v1385, 0.0
    %v2264 = vmax.f32 %v1388, 0.0
    %v2265 = vmax.f32 %v1393, 0.0
    %v2266 = vmax.f32 %v1396, 0.0
    %v2267 = vmax.f32 %v1401, 0.0
    %v2268 = vmax.f32 %v1404, 0.0
    %v2269 = vmax.f32 %v1409, 0.0
    %v2270 = vmax.f32 %v1412, 0.0
    %v2271 = vmax.f32 %v1417, 0.0
    %v2272 = vmax.f32 %v1420, 0.0
    %v2273 = vmax.f32 %v1425, 0.0
    %v2274 = vmax.f32 %v1428, 0.0
    %v2275 = vmax.f32 %v1433, 0.0
    %v2276 = vmax.f32 %v1436, 0.0
    %v2277 = vmax.f32 %v1441, 0.0
    %v2278 = vmax.f32 %v1444, 0.0
    %v2279 = vmax.f32 %v1449, 0.0
    %v2280 = vmax.f32 %v1452, 0.0
    %v2281 = vmax.f32 %v1457, 0.0
    %v2282 = vmax.f32 %v1460, 0.0
    %v2283 = vmax.f32 %v1465, 0.0
    %v2284 = vmax.f32 %v1468, 0.0
    %v2285 = vmax.f32 %v1473, 0.0
    %v2286 = vmax.f32 %v1476, 0.0
    %v2287 = vmax.f32 %v1481, 0.0
    %v2288 = vmax.f32 %v1484, 0.0
    %v2289 = vmax.f32 %v1489, 0.0
    %v2290 = vmax.f32 %v1492, 0.0
    %v2291 = vmax.f32 %v1497, 0.0
    %v2292 = vmax.f32 %v1500, 0.0
    %v2293 = vmax.f32 %v1505, 0.0
    %v2294 = vmax.f32 %v1508, 0.0
    %v2295 = vmax.f32 %v1513, 0.0
    %v2296 = vmax.f32 %v1516, 0.0
    %v2297 = vmax.f32 %v1521, 0.0
    %v2298 = vmax.f32 %v1524, 0.0
    %v2299 = vmax.f32 %v1529, 0.0
    %v2300 = vmax.f32 %v1532, 0.0
    %v2301 = vmax.f32 %v1537, 0.0
    %v2302 = vmax.f32 %v1540, 0.0
    %v2303 = vmax.f32 %v1545, 0.0
    %v2304 = vmax.f32 %v1548, 0.0
    %v2305 = vmax.f32 %v1553, 0.0
    %v2306 = vmax.f32 %v1556, 0.0
    %v2307 = vmax.f32 %v1561, 0.0
    %v2308 = vmax.f32 %v1564, 0.0
    %v2309 = vmax.f32 %v1569, 0.0
    %v2310 = vmax.f32 %v1572, 0.0
    %v2311 = vmax.f32 %v1577, 0.0
    %v2312 = vmax.f32 %v1580, 0.0
    %v2313 = vmax.f32 %v1585, 0.0
    %v2314 = vmax.f32 %v1588, 0.0
    %v2315 = vmax.f32 %v1593, 0.0
    %v2316 = vmax.f32 %v1596, 0.0
    %v2317 = vmax.f32 %v1601, 0.0
    %v2318 = vmax.f32 %v1604, 0.0
    %v2319 = vmax.f32 %v1609, 0.0
    %v2320 = vmax.f32 %v1612, 0.0
    %v2321 = vmax.f32 %v1617, 0.0
    %v2322 = vmax.f32 %v1620, 0.0
    %v2323 = vmax.f32 %v1625, 0.0
    %v2324 = vmax.f32 %v1628, 0.0
    %v2325 = vmax.f32 %v1633, 0.0
    %v2326 = vmax.f32 %v1636, 0.0
    %v2327 = vmax.f32 %v1641, 0.0
    %v2328 = vmax.f32 %v1644, 0.0
    %v2329 = vmax.f32 %v1649, 0.0
    %v2330 = vmax.f32 %v1652, 0.0
    %v2331 = vmax.f32 %v1657, 0.0
    %v2332 = vmax.f32 %v1660, 0.0
    %v2333 = vmax.f32 %v1665, 0.0
    %v2334 = vmax.f32 %v1668, 0.0
    %v2335 = vmax.f32 %v1673, 0.0
    %v2336 = vmax.f32 %v1676, 0.0
    %v2337 = vmax.f32 %v1681, 0.0
    %v2338 = vmax.f32 %v1684, 0.0
    %v2339 = vmax.f32 %v1689, 0.0
    %v2340 = vmax.f32 %v1692, 0.0
    %v2341 = vmax.f32 %v1697, 0.0
    %v2342 = vmax.f32 %v1700, 0.0
    %v2343 = vmax.f32 %v1705, 0.0
    %v2344 = vmax.f32 %v1708, 0.0
    %v2345 = vmax.f32 %v1713, 0.0
    %v2346 = vmax.f32 %v1716, 0.0
    %v2347 = vmax.f32 %v1721, 0.0
    %v2348 = vmax.f32 %v1724, 0.0
    %v2349 = vmax.f32 %v1729, 0.0
    %v2350 = vmax.f32 %v1732, 0.0
    %v2351 = vmax.f32 %v1737, 0.0
    %v2352 = vmax.f32 %v1740, 0.0
    %v2353 = vmax.f32 %v1745, 0.0
    %v2354 = vmax.f32 %v1748, 0.0
    %v2355 = vmax.f32 %v1753, 0.0
    %v2356 = vmax.f32 %v1756, 0.0
    %v2357 = vmax.f32 %v1761, 0.0
    %v2358 = vmax.f32 %v1764, 0.0
    %v2359 = vmax.f32 %v1769, 0.0
    %v2360 = vmax.f32 %v1772, 0.0
    %v2361 = vmax.f32 %v1777, 0.0
    %v2362 = vmax.f32 %v1780, 0.0
    %v2363 = vmax.f32 %v1785, 0.0
    %v2364 = vmax.f32 %v1788, 0.0
    %v2365 = vmax.f32 %v1793, 0.0
    %v2366 = vmax.f32 %v1796, 0.0
    %v2367 = vmax.f32 %v1801, 0.0
    %v2368 = vmax.f32 %v1804, 0.0
    %v2369 = vmax.f32 %v1809, 0.0
    %v2370 = vmax.f32 %v1812, 0.0
    %v2371 = vmax.f32 %v1817, 0.0
    %v2372 = vmax.f32 %v1820, 0.0
    %v2373 = vmax.f32 %v1825, 0.0
    %v2374 = vmax.f32 %v1828, 0.0
    %v2375 = vmax.f32 %v1833, 0.0
    %v2376 = vmax.f32 %v1836, 0.0
    %v2377 = vmax.f32 %v1841, 0.0
    %v2378 = vmax.f32 %v1844, 0.0
    %v2379 = vmax.f32 %v1849, 0.0
    %v2380 = vmax.f32 %v1852, 0.0
    %v2381 = vmax.f32 %v1857, 0.0
    %v2382 = vmax.f32 %v1860, 0.0
    %v2383 = vmax.f32 %v1865, 0.0
    %v2384 = vmax.f32 %v1868, 0.0
    %v2385 = vmax.f32 %v1873, 0.0
    %v2386 = vmax.f32 %v1876, 0.0
    %v2387 = vmax.f32 %v1881, 0.0
    %v2388 = vmax.f32 %v1884, 0.0
    %v2389 = vmax.f32 %v1889, 0.0
    %v2390 = vmax.f32 %v1892, 0.0
    %v2391 = vmax.f32 %v1897, 0.0
    %v2392 = vmax.f32 %v1900, 0.0
    %v2393 = vmax.f32 %v1905, 0.0
    %v2394 = vmax.f32 %v1908, 0.0
    %v2395 = vmax.f32 %v1913, 0.0
    %v2396 = vmax.f32 %v1916, 0.0
    %v2397 = vmax.f32 %v1921, 0.0
    %v2398 = vmax.f32 %v1924, 0.0
    %v2399 = vmax.f32 %v1929, 0.0
    %v2400 = vmax.f32 %v1932, 0.0
    %v2401 = vmax.f32 %v1937, 0.0
    %v2402 = vmax.f32 %v1940, 0.0
    %v2403 = vmax.f32 %v1945, 0.0
    %v2404 = vmax.f32 %v1948, 0.0
    %v2405 = vmax.f32 %v1953, 0.0
    %v2406 = vmax.f32 %v1956, 0.0
    %v2407 = vmax.f32 %v1961, 0.0
    %v2408 = vmax.f32 %v1964, 0.0
    %v2409 = vmax.f32 %v1969, 0.0
    %v2410 = vmax.f32 %v1972, 0.0
    %v2411 = vmax.f32 %v1977, 0.0
    %v2412 = vmax.f32 %v1980, 0.0
    %v2413 = vmax.f32 %v1985, 0.0
    %v2414 = vmax.f32 %v1988, 0.0
    %v2415 = vmax.f32 %v1993, 0.0
    %v2416 = vmax.f32 %v1996, 0.0
    %v2417 = vmax.f32 %v2001, 0.0
    %v2418 = vmax.f32 %v2004, 0.0
    %v2419 = vmax.f32 %v2009, 0.0
    %v2420 = vmax.f32 %v2012, 0.0
    %v2421 = vmax.f32 %v2017, 0.0
    %v2422 = vmax.f32 %v2020, 0.0
    %v2423 = vmax.f32 %v2025, 0.0
    %v2424 = vmax.f32 %v2028, 0.0
    %v2425 = vmax.f32 %v2033, 0.0
    %v2426 = vmax.f32 %v2036, 0.0
    %v2427 = vmax.f32 %v2041, 0.0
    %v2428 = vmax.f32 %v2044, 0.0
    %v2429 = vmax.f32 %v2049, 0.0
    %v2430 = vmax.f32 %v2052, 0.0
    %v2431 = vmax.f32 %v2057, 0.0
    %v2432 = vmax.f32 %v2060, 0.0
    %v2433 = vmax.f32 %v2065, 0.0
    %v2434 = vmax.f32 %v2068, 0.0
    %v2435 = vmax.f32 %v2073, 0.0
    %v2436 = vmax.f32 %v2076, 0.0
    %v2437 = vmax.f32 %v2081, 0.0
    %v2438 = vmax.f32 %v2084, 0.0
    %v2439 = vmax.f32 %v2089, 0.0
    %v2440 = vmax.f32 %v2092, 0.0
    %v2441 = vmax.f32 %v2097, 0.0
    %v2442 = vmax.f32 %v2100, 0.0
    %v2443 = vmax.f32 %v2105, 0.0
    %v2444 = vmax.f32 %v2108, 0.0
    %v2445 = vmax.f32 %v2113, 0.0
    %v2446 = vmax.f32 %v2116, 0.0
    %v2447 = vmax.f32 %v2121, 0.0
    %v2448 = vmax.f32 %v2124, 0.0
    %v2449 = vmax.f32 %v2129, 0.0
    %v2450 = vmax.f32 %v2132, 0.0
    %v2451 = vmax.f32 %v2137, 0.0
    %v2452 = vmax.f32 %v2140, 0.0
    %v2453 = vmax.f32 %v2145, 0.0
    %v2454 = vmax.f32 %v2148, 0.0
    %v2455 = vmax.f32 %v2153, 0.0
    %v2456 = vmax.f32 %v2156, 0.0
    %v2457 = vmax.f32 %v2161, 0.0
    %v2458 = vmax.f32 %v2164, 0.0
    %v2459 = vmax.f32 %v2169, 0.0
    %v2460 = vmax.f32 %v2172, 0.0
    %v2461 = vmax.f32 %v2177, 0.0
    %v2462 = vmax.f32 %v2180, 0.0
    %v2463 = vmax.f32 %v2185, 0.0
    %v2464 = vmax.f32 %v2188, 0.0
    %v2465 = vmax.f32 %v2193, 0.0
    %v2466 = vmax.f32 %v2196, 0.0
    %v2467 = vmax.f32 %v2201, 0.0
    %v2468 = vmax.f32 %v2204, 0.0
    %v2469 = vmax.f32 %v2209, 0.0
    %v2470 = vmax.f32 %v2212, 0.0
    %v2471 = vadd.f32 %v2215, %v2216
    %v2472 = vadd.f32 %v2471, %v2217
    %v2473 = vadd.f32 %v2472, %v2218
    %v2474 = vadd.f32 %v2473, %v2219
    %v2475 = vadd.f32 %v2474, %v2220
    %v2476 = vadd.f32 %v2475, %v2221
    %v2477 = vadd.f32 %v2476, %v2222
    %v2478 = vadd.f32 %v2477, %v2223
    %v2479 = vadd.f32 %v2478, %v2224
    %v2480 = vadd.f32 %v2479, %v2225
    %v2481 = vadd.f32 %v2480, %v2226
    %v2482 = vadd.f32 %v2481, %v2227
    %v2483 = vadd.f32 %v2482, %v2228
    %v2484 = vadd.f32 %v2483, %v2229
    %v2485 = vadd.f32 %v2484, %v2230
    %v2486 = vadd.f32 %v2485, %v2231
    %v2487 = vadd.f32 %v2486, %v2232
    %v2488 = vadd.f32 %v2487, %v2233
    %v2489 = vadd.f32 %v2488, %v2234
    %v2490 = vadd.f32 %v2489, %v2235
    %v2491 = vadd.f32 %v2490, %v2236
    %v2492 = vadd.f32 %v2491, %v2237
    %v2493 = vadd.f32 %v2492, %v2238
    %v2494 = vadd.f32 %v2493, %v2239
    %v2495 = vadd.f32 %v2494, %v2240
    %v2496 = vadd.f32 %v2495, %v2241
    %v2497 = vadd.f32 %v2496, %v2242
    %v2498 = vadd.f32 %v2497, %v2243
    %v2499 = vadd.f32 %v2498, %v2244
    %v2500 = vadd.f32 %v2499, %v2245
    %v2501 = vadd.f32 %v2500, %v2246
    %v2502 = vrot.slane %v2501, 4
    %v2503 = vadd.f32 %v2501, %v2502
    %v2504 = vrot.slane %v2503, 2
    %v2505 = vadd.f32 %v2503, %v2504
    %v2506 = vrot.slane %v2505, 1
    %v2507 = vadd.f32 %v2505, %v2506
    %v2508 = vadd.f32 %v2247, %v2248
    %v2509 = vadd.f32 %v2508, %v2249
    %v2510 = vadd.f32 %v2509, %v2250
    %v2511 = vadd.f32 %v2510, %v2251
    %v2512 = vadd.f32 %v2511, %v2252
    %v2513 = vadd.f32 %v2512, %v2253
    %v2514 = vadd.f32 %v2513, %v2254
    %v2515 = vadd.f32 %v2514, %v2255
    %v2516 = vadd.f32 %v2515, %v2256
    %v2517 = vadd.f32 %v2516, %v2257
    %v2518 = vadd.f32 %v2517, %v2258
    %v2519 = vadd.f32 %v2518, %v2259
    %v2520 = vadd.f32 %v2519, %v2260
    %v2521 = vadd.f32 %v2520, %v2261
    %v2522 = vadd.f32 %v2521, %v2262
    %v2523 = vadd.f32 %v2522, %v2263
    %v2524 = vadd.f32 %v2523, %v2264
    %v2525 = vadd.f32 %v2524, %v2265
    %v2526 = vadd.f32 %v2525, %v2266
    %v2527 = vadd.f32 %v2526, %v2267
    %v2528 = vadd.f32 %v2527, %v2268
    %v2529 = vadd.f32 %v2528, %v2269
    %v2530 = vadd.f32 %v2529, %v2270
    %v2531 = vadd.f32 %v2530, %v2271
    %v2532 = vadd.f32 %v2531, %v2272
    %v2533 = vadd.f32 %v2532, %v2273
    %v2534 = vadd.f32 %v2533, %v2274
    %v2535 = vadd.f32 %v2534, %v2275
    %v2536 = vadd.f32 %v2535, %v2276
    %v2537 = vadd.f32 %v2536, %v2277
    %v2538 = vadd.f32 %v2537, %v2278
    %v2539 = vrot.slane %v2538, 4
    %v2540 = vadd.f32 %v2538, %v2539
    %v2541 = vrot.slane %v2540, 2
    %v2542 = vadd.f32 %v2540, %v2541
    %v2543 = vrot.slane %v2542, 1
    %v2544 = vadd.f32 %v2542, %v2543
    %v2545 = vadd.f32 %v2279, %v2280
    %v2546 = vadd.f32 %v2545, %v2281
    %v2547 = vadd.f32 %v2546, %v2282
    %v2548 = vadd.f32 %v2547, %v2283
    %v2549 = vadd.f32 %v2548, %v2284
    %v2550 = vadd.f32 %v2549, %v2285
    %v2551 = vadd.f32 %v2550, %v2286
    %v2552 = vadd.f32 %v2551, %v2287
    %v2553 = vadd.f32 %v2552, %v2288
    %v2554 = vadd.f32 %v2553, %v2289
    %v2555 = vadd.f32 %v2554, %v2290
    %v2556 = vadd.f32 %v2555, %v2291
    %v2557 = vadd.f32 %v2556, %v2292
    %v2558 = vadd.f32 %v2557, %v2293
    %v2559 = vadd.f32 %v2558, %v2294
    %v2560 = vadd.f32 %v2559, %v2295
    %v2561 = vadd.f32 %v2560, %v2296
    %v2562 = vadd.f32 %v2561, %v2297
    %v2563 = vadd.f32 %v2562, %v2298
    %v2564 = vadd.f32 %v2563, %v2299
    %v2565 = vadd.f32 %v2564, %v2300
    %v2566 = vadd.f32 %v2565, %v2301
    %v2567 = vadd.f32 %v2566, %v2302
    %v2568 = vadd.f32 %v2567, %v2303
    %v2569 = vadd.f32 %v2568, %v2304
    %v2570 = vadd.f32 %v2569, %v2305
    %v2571 = vadd.f32 %v2570, %v2306
    %v2572 = vadd.f32 %v2571, %v2307
    %v2573 = vadd.f32 %v2572, %v2308
    %v2574 = vadd.f32 %v2573, %v2309
    %v2575 = vadd.f32 %v2574, %v2310
    %v2576 = vrot.slane %v2575, 4
    %v2577 = vadd.f32 %v2575, %v2576
    %v2578 = vrot.slane %v2577, 2
    %v2579 = vadd.f32 %v2577, %v2578
    %v2580 = vrot.slane %v2579, 1
    %v2581 = vadd.f32 %v2579, %v2580
    %v2582 = vadd.f32 %v2311, %v2312
    %v2583 = vadd.f32 %v2582, %v2313
    %v2584 = vadd.f32 %v2583, %v2314
    %v2585 = vadd.f32 %v2584, %v2315
    %v2586 = vadd.f32 %v2585, %v2316
    %v2587 = vadd.f32 %v2586, %v2317
    %v2588 = vadd.f32 %v2587, %v2318
    %v2589 = vadd.f32 %v2588, %v2319
    %v2590 = vadd.f32 %v2589, %v2320
    %v2591 = vadd.f32 %v2590, %v2321
    %v2592 = vadd.f32 %v2591, %v2322
    %v2593 = vadd.f32 %v2592, %v2323
    %v2594 = vadd.f32 %v2593, %v2324
    %v2595 = vadd.f32 %v2594, %v2325
    %v2596 = vadd.f32 %v2595, %v2326
    %v2597 = vadd.f32 %v2596, %v2327
    %v2598 = vadd.f32 %v2597, %v2328
    %v2599 = vadd.f32 %v2598, %v2329
    %v2600 = vadd.f32 %v2599, %v2330
    %v2601 = vadd.f32 %v2600, %v2331
    %v2602 = vadd.f32 %v2601, %v2332
    %v2603 = vadd.f32 %v2602, %v2333
    %v2604 = vadd.f32 %v2603, %v2334
    %v2605 = vadd.f32 %v2604, %v2335
    %v2606 = vadd.f32 %v2605, %v2336
    %v2607 = vadd.f32 %v2606, %v2337
    %v2608 = vadd.f32 %v2607, %v2338
    %v2609 = vadd.f32 %v2608, %v2339
    %v2610 = vadd.f32 %v2609, %v2340
    %v2611 = vadd.f32 %v2610, %v2341
    %v2612 = vadd.f32 %v2611, %v2342
    %v2613 = vrot.slane %v2612, 4
    %v2614 = vadd.f32 %v2612, %v2613
    %v2615 = vrot.slane %v2614, 2
    %v2616 = vadd.f32 %v2614, %v2615
    %v2617 = vrot.slane %v2616, 1
    %v2618 = vadd.f32 %v2616, %v2617
    %v2619 = vadd.f32 %v2343, %v2344
    %v2620 = vadd.f32 %v2619, %v2345
    %v2621 = vadd.f32 %v2620, %v2346
    %v2622 = vadd.f32 %v2621, %v2347
    %v2623 = vadd.f32 %v2622, %v2348
    %v2624 = vadd.f32 %v2623, %v2349
    %v2625 = vadd.f32 %v2624, %v2350
    %v2626 = vadd.f32 %v2625, %v2351
    %v2627 = vadd.f32 %v2626, %v2352
    %v2628 = vadd.f32 %v2627, %v2353
    %v2629 = vadd.f32 %v2628, %v2354
    %v2630 = vadd.f32 %v2629, %v2355
    %v2631 = vadd.f32 %v2630, %v2356
    %v2632 = vadd.f32 %v2631, %v2357
    %v2633 = vadd.f32 %v2632, %v2358
    %v2634 = vadd.f32 %v2633, %v2359
    %v2635 = vadd.f32 %v2634, %v2360
    %v2636 = vadd.f32 %v2635, %v2361
    %v2637 = vadd.f32 %v2636, %v2362
    %v2638 = vadd.f32 %v2637, %v2363
    %v2639 = vadd.f32 %v2638, %v2364
    %v2640 = vadd.f32 %v2639, %v2365
    %v2641 = vadd.f32 %v2640, %v2366
    %v2642 = vadd.f32 %v2641, %v2367
    %v2643 = vadd.f32 %v2642, %v2368
    %v2644 = vadd.f32 %v2643, %v2369
    %v2645 = vadd.f32 %v2644, %v2370
    %v2646 = vadd.f32 %v2645, %v2371
    %v2647 = vadd.f32 %v2646, %v2372
    %v2648 = vadd.f32 %v2647, %v2373
    %v2649 = vadd.f32 %v2648, %v2374
    %v2650 = vrot.slane %v2649, 4
    %v2651 = vadd.f32 %v2649, %v2650
    %v2652 = vrot.slane %v2651, 2
    %v2653 = vadd.f32 %v2651, %v2652
    %v2654 = vrot.slane %v2653, 1
    %v2655 = vadd.f32 %v2653, %v2654
    %v2656 = vadd.f32 %v2375, %v2376
    %v2657 = vadd.f32 %v2656, %v2377
    %v2658 = vadd.f32 %v2657, %v2378
    %v2659 = vadd.f32 %v2658, %v2379
    %v2660 = vadd.f32 %v2659, %v2380
    %v2661 = vadd.f32 %v2660, %v2381
    %v2662 = vadd.f32 %v2661, %v2382
    %v2663 = vadd.f32 %v2662, %v2383
    %v2664 = vadd.f32 %v2663, %v2384
    %v2665 = vadd.f32 %v2664, %v2385
    %v2666 = vadd.f32 %v2665, %v2386
    %v2667 = vadd.f32 %v2666, %v2387
    %v2668 = vadd.f32 %v2667, %v2388
    %v2669 = vadd.f32 %v2668, %v2389
    %v2670 = vadd.f32 %v2669, %v2390
    %v2671 = vadd.f32 %v2670, %v2391
    %v2672 = vadd.f32 %v2671, %v2392
    %v2673 = vadd.f32 %v2672, %v2393
    %v2674 = vadd.f32 %v2673, %v2394
    %v2675 = vadd.f32 %v2674, %v2395
    %v2676 = vadd.f32 %v2675, %v2396
    %v2677 = vadd.f32 %v2676, %v2397
    %v2678 = vadd.f32 %v2677, %v2398
    %v2679 = vadd.f32 %v2678, %v2399
    %v2680 = vadd.f32 %v2679, %v2400
    %v2681 = vadd.f32 %v2680, %v2401
    %v2682 = vadd.f32 %v2681, %v2402
    %v2683 = vadd.f32 %v2682, %v2403
    %v2684 = vadd.f32 %v2683, %v2404
    %v2685 = vadd.f32 %v2684, %v2405
    %v2686 = vadd.f32 %v2685, %v2406
    %v2687 = vrot.slane %v2686, 4
    %v2688 = vadd.f32 %v2686, %v2687
    %v2689 = vrot.slane %v2688, 2
    %v2690 = vadd.f32 %v2688, %v2689
    %v2691 = vrot.slane %v2690, 1
    %v2692 = vadd.f32 %v2690, %v2691
    %v2693 = vadd.f32 %v2407, %v2408
    %v2694 = vadd.f32 %v2693, %v2409
    %v2695 = vadd.f32 %v2694, %v2410
    %v2696 = vadd.f32 %v2695, %v2411
    %v2697 = vadd.f32 %v2696, %v2412
    %v2698 = vadd.f32 %v2697, %v2413
    %v2699 = vadd.f32 %v2698, %v2414
    %v2700 = vadd.f32 %v2699, %v2415
    %v2701 = vadd.f32 %v2700, %v2416
    %v2702 = vadd.f32 %v2701, %v2417
    %v2703 = vadd.f32 %v2702, %v2418
    %v2704 = vadd.f32 %v2703, %v2419
    %v2705 = vadd.f32 %v2704, %v2420
    %v2706 = vadd.f32 %v2705, %v2421
    %v2707 = vadd.f32 %v2706, %v2422
    %v2708 = vadd.f32 %v2707, %v2423
    %v2709 = vadd.f32 %v2708, %v2424
    %v2710 = vadd.f32 %v2709, %v2425
    %v2711 = vadd.f32 %v2710, %v2426
    %v2712 = vadd.f32 %v2711, %v2427
    %v2713 = vadd.f32 %v2712, %v2428
    %v2714 = vadd.f32 %v2713, %v2429
    %v2715 = vadd.f32 %v2714, %v2430
    %v2716 = vadd.f32 %v2715, %v2431
    %v2717 = vadd.f32 %v2716, %v2432
    %v2718 = vadd.f32 %v2717, %v2433
    %v2719 = vadd.f32 %v2718, %v2434
    %v2720 = vadd.f32 %v2719, %v2435
    %v2721 = vadd.f32 %v2720, %v2436
    %v2722 = vadd.f32 %v2721, %v2437
    %v2723 = vadd.f32 %v2722, %v2438
    %v2724 = vrot.slane %v2723, 4
    %v2725 = vadd.f32 %v2723, %v2724
    %v2726 = vrot.slane %v2725, 2
    %v2727 = vadd.f32 %v2725, %v2726
    %v2728 = vrot.slane %v2727, 1
    %v2729 = vadd.f32 %v2727, %v2728
    %v2730 = vadd.f32 %v2439, %v2440
    %v2731 = vadd.f32 %v2730, %v2441
    %v2732 = vadd.f32 %v2731, %v2442
    %v2733 = vadd.f32 %v2732, %v2443
    %v2734 = vadd.f32 %v2733, %v2444
    %v2735 = vadd.f32 %v2734, %v2445
    %v2736 = vadd.f32 %v2735, %v2446
    %v2737 = vadd.f32 %v2736, %v2447
    %v2738 = vadd.f32 %v2737, %v2448
    %v2739 = vadd.f32 %v2738, %v2449
    %v2740 = vadd.f32 %v2739, %v2450
    %v2741 = vadd.f32 %v2740, %v2451
    %v2742 = vadd.f32 %v2741, %v2452
    %v2743 = vadd.f32 %v2742, %v2453
    %v2744 = vadd.f32 %v2743, %v2454
    %v2745 = vadd.f32 %v2744, %v2455
    %v2746 = vadd.f32 %v2745, %v2456
    %v2747 = vadd.f32 %v2746, %v2457
    %v2748 = vadd.f32 %v2747, %v2458
    %v2749 = vadd.f32 %v2748, %v2459
    %v2750 = vadd.f32 %v2749, %v2460
    %v2751 = vadd.f32 %v2750, %v2461
    %v2752 = vadd.f32 %v2751, %v2462
    %v2753 = vadd.f32 %v2752, %v2463
    %v2754 = vadd.f32 %v2753, %v2464
    %v2755 = vadd.f32 %v2754, %v2465
    %v2756 = vadd.f32 %v2755, %v2466
    %v2757 = vadd.f32 %v2756, %v2467
    %v2758 = vadd.f32 %v2757, %v2468
    %v2759 = vadd.f32 %v2758, %v2469
    %v2760 = vadd.f32 %v2759, %v2470
    %v2761 = vrot.slane %v2760, 4
    %v2762 = vadd.f32 %v2760, %v2761
    %v2763 = vrot.slane %v2762, 2
    %v2764 = vadd.f32 %v2762, %v2763
    %v2765 = vrot.slane %v2764, 1
    %v2766 = vadd.f32 %v2764, %v2765
    %v2767 = vld [vmem:[#allocation2] sm:$0xff]
    %vm2776 = vcmask 1041409
    %v2777 = vsel %vm2776, %v2544, %v2507
    %vm2778 = vcmask 1042434
    %v2779 = vsel %vm2778, %v2581, %v2777
    %vm2780 = vcmask 1043459
    %v2781 = vsel %vm2780, %v2618, %v2779
    %vm2782 = vcmask 1044484
    %v2783 = vsel %vm2782, %v2655, %v2781
    %vm2784 = vcmask 1045509
    %v2785 = vsel %vm2784, %v2692, %v2783
    %vm2786 = vcmask 1046534
    %v2787 = vsel %vm2786, %v2729, %v2785
    %vm2788 = vcmask 1047559
    %v2789 = vsel %vm2788, %v2766, %v2787
    %v2791 = vadd.f32 %v2767, %v2789
    %2792 = vst [vmem:[#allocation2] sm:$0xff] %v2791
    // Predicated region
    $region46: #{tpu_custom_call.1} parent=1 // pred_check
      %p2793 = pneg %p84
    $region47: #{tpu_custom_call.1} parent=1 // pred_check_branch
      %2795 = sbr.rel (%p2793) target = $region49
    $region48: #{tpu_custom_call.1} parent=1 // pred_region
      %v2796 = vld [vmem:[#allocation2] sm:$0xff]
      %v2797 = vmul.f32 %v2796, 0.00390625
      %v2798 = vpack.c.bf16 %v2797, %v2797
      %v2799 = vld [vmem:[#allocation9] sm:$0xf]
      %v2800 = vld [vmem:[#allocation9 + $0x4] sm:$0xf]
      %v2801 = vld [vmem:[#allocation9 + $0x8] sm:$0xf]
      %v2802 = vld [vmem:[#allocation9 + $0xc] sm:$0xf]
      %v2803 = vld [vmem:[#allocation9 + $0x10] sm:$0xf]
      %v2804 = vld [vmem:[#allocation9 + $0x14] sm:$0xf]
      %v2805 = vld [vmem:[#allocation9 + $0x18] sm:$0xf]
      %v2806 = vld [vmem:[#allocation9 + $0x1c] sm:$0xf]
      %v2807 = vld [vmem:[#allocation9 + $0x20] sm:$0xf]
      %v2808 = vld [vmem:[#allocation9 + $0x24] sm:$0xf]
      %v2809 = vld [vmem:[#allocation9 + $0x28] sm:$0xf]
      %v2810 = vld [vmem:[#allocation9 + $0x2c] sm:$0xf]
      %v2811 = vld [vmem:[#allocation9 + $0x30] sm:$0xf]
      %v2812 = vld [vmem:[#allocation9 + $0x34] sm:$0xf]
      %v2813 = vld [vmem:[#allocation9 + $0x38] sm:$0xf]
      %v2814 = vld [vmem:[#allocation9 + $0x3c] sm:$0xf]
      %v2815 = vld [vmem:[#allocation11] sm:$0x1]
      %v2817 = vlaneseq
      %v2818 = vshrl.u32 %v2817, 7
      %v2819 = vsub.s32 0, %v2818
      %v2820 = vrot.slane %v2815, %v2819
      %v2838 = vunpack.c.l.b16 %v2799
      %v2839 = vunpack.c.l.b16 %v2800
      %v2840 = vunpack.c.l.b16 %v2801
      %v2841 = vunpack.c.l.b16 %v2802
      %v2842 = vunpack.c.l.b16 %v2803
      %v2843 = vunpack.c.l.b16 %v2804
      %v2844 = vunpack.c.l.b16 %v2805
      %v2845 = vunpack.c.l.b16 %v2806
      %v2846 = vunpack.c.l.b16 %v2807
      %v2847 = vunpack.c.l.b16 %v2808
      %v2848 = vunpack.c.l.b16 %v2809
      %v2849 = vunpack.c.l.b16 %v2810
      %v2850 = vunpack.c.l.b16 %v2811
      %v2851 = vunpack.c.l.b16 %v2812
      %v2852 = vunpack.c.l.b16 %v2813
      %v2853 = vunpack.c.l.b16 %v2814
      %v2854 = vpack.c.b16 %v2839, %v2838
      %v2855 = vpack.c.b16 %v2841, %v2840
      %v2856 = vpack.c.b16 %v2843, %v2842
      %v2857 = vpack.c.b16 %v2845, %v2844
      %v2858 = vpack.c.b16 %v2847, %v2846
      %v2859 = vpack.c.b16 %v2849, %v2848
      %v2860 = vpack.c.b16 %v2851, %v2850
      %v2861 = vpack.c.b16 %v2853, %v2852
      %2870 = vmatprep.subr.bf16.mxu0 0
      %2871 = vmatpush1.bf16.msra.mxu0 %v2854
      %2872 = vmatprep.subr.bf16.mxu0 0
      %2873 = vmatpush1.bf16.msra.mxu0 %v2855
      %2874 = vmatprep.subr.bf16.mxu0 0
      %2875 = vmatpush1.bf16.msra.mxu0 %v2856
      %2876 = vmatprep.subr.bf16.mxu0 0
      %2877 = vmatpush1.bf16.msra.mxu0 %v2857
      %2878 = vmatprep.subr.bf16.mxu0 0
      %2879 = vmatpush1.bf16.msra.mxu0 %v2858
      %2880 = vmatprep.subr.bf16.mxu0 0
      %2881 = vmatpush1.bf16.msra.mxu0 %v2859
      %2882 = vmatprep.subr.bf16.mxu0 0
      %2883 = vmatpush1.bf16.msra.mxu0 %v2860
      %2884 = vmatprep.subr.bf16.mxu0 0
      %2885 = vmatpush1.bf16.msra.mxu0 %v2861
      %2886 = vmatprep.subr.bf16.mxu0 0
      %2887 = vmatpush1.bf16.msra.mxu0 0
      %2888 = vmatprep.subr.bf16.mxu0 0
      %2889 = vmatpush1.bf16.msra.mxu0 0
      %2890 = vmatprep.subr.bf16.mxu0 0
      %2891 = vmatpush1.bf16.msra.mxu0 0
      %2892 = vmatprep.subr.bf16.mxu0 0
      %2893 = vmatpush1.bf16.msra.mxu0 0
      %2894 = vmatprep.subr.bf16.mxu0 0
      %2895 = vmatpush1.bf16.msra.mxu0 0
      %2896 = vmatprep.subr.bf16.mxu0 0
      %2897 = vmatpush1.bf16.msra.mxu0 0
      %2898 = vmatprep.subr.bf16.mxu0 0
      %2899 = vmatpush1.bf16.msra.mxu0 0
      %2900 = vmatprep.subr.bf16.mxu0 0
      %2901 = vmatpush1.bf16.msra.mxu0 0
      %2902 = vmatprep.mubr.bf16.mxu0 0
      %2903 = vmatmul.mubr.bf16.gmra.mrb[0].mxu0 %v2798
      %v2904 = vpop.f32.mrb[0].mxu0
      %v2905 = vadd.f32 %v2820, %v2904
      %v2906 = vpop.f32.mrb[0].mxu0
      %v2907 = vpop.f32.mrb[0].mxu0
      %v2908 = vpop.f32.mrb[0].mxu0
      %2909 = vdwg.mxu0
      %2910 = vst [vmem:[#allocation12] sm:$0xff] %v2905
    $region49: #{tpu_custom_call.1} parent=1 // pred_fallthru
      _
    // Predicated region
    $region50: #{tpu_custom_call.1} parent=1 // pred_check
      _
    $region51: #{tpu_custom_call.1} parent=1 // pred_check_branch
      %2912 = sbr.rel (0) target = $region53
    $region52: #{tpu_custom_call.1} parent=1 // pred_region
      %s2914 = ssub.s32 128, 128
      %2915 = vsyncadd [#allocation5], %s2914
      %s2917 = sshll.u32 [#allocation12], 4
      %s2918 = int_to_ptr.vmem [resolvable:$true] %s2917
      %2920 = dma.vmem_to_hbm [thread:$0]  %s2918, 128, %s5, [#allocation5]
    $region53: #{tpu_custom_call.1} parent=1 // pred_fallthru
      _
    // Predicated region
    $region54: #{tpu_custom_call.1} parent=1 // pred_check
      _
    $region55: #{tpu_custom_call.1} parent=1 // pred_check_branch
      %2922 = sbr.rel (0) target = $region57
    $region56: #{tpu_custom_call.1} parent=1 // pred_region
      %2923 = dma.done [#allocation5], 128
    $region57: #{tpu_custom_call.1} parent=1 // pred_fallthru
      _
    %2924 = vsyncpa [#allocation4], 1
    %2925 = vsyncpa [#allocation7], 1
    %2926 = vsyncpa [#allocation10], 1
    %2927 = vsyncpa [#allocation5], 1

</llo_original>
